<compile_context>
chip_gen: v5e
topology: v5e:2x2
jax: 0.10.0
libtpu: 0.0.40
codegen_flags: <defaults>
</compile_context>

<pallas_src>
import math

import jax
import jax.numpy as jnp
from jax import lax
from jax.experimental import pallas as pl
from jax.experimental.pallas import tpu as pltpu


def _round_up(a: int, b: int) -> int:
    return (a + b - 1) // b * b


def _layer_norm(v, gamma, beta, eps):
    mu = jnp.mean(v, axis=-1, keepdims=True)
    var = jnp.mean((v - mu) * (v - mu), axis=-1, keepdims=True)
    return (v - mu) * lax.rsqrt(var + eps) * gamma + beta


def make_transformer_block_kernel(*, num_heads: int, head_dim: int, q_tile: int,
                                  eps: float = 1e-5):
    """Returns the Pallas kernel body, closed over static configuration."""
    H, D, TQ = num_heads, head_dim, q_tile
    C = H * D
    scale = 1.0 / math.sqrt(D)

    def kernel(x_ref, xq_ref,
               ln1_g_ref, ln1_b_ref,
               wq_ref, wk_ref, wv_ref,
               wo_ref, bo_ref,
               ln2_g_ref, ln2_b_ref,
               w1_ref, b1_ref,
               w2_ref, b2_ref,
               out_ref,
               k_scr, v_scr, q_scr,
               m_scr, l_scr, acc_scr):
        qi = pl.program_id(1)
        q0 = qi * TQ  # global row offset of this query tile

        ln1_g = ln1_g_ref[0]
        ln1_b = ln1_b_ref[0]

        # ---- LN1 over the full (padded) sequence + K/V projections (bf16, head-major) ----
        x_all = x_ref[0].astype(jnp.float32)                              # (T_pad, C)
        h_all = _layer_norm(x_all, ln1_g, ln1_b, eps).astype(jnp.bfloat16)
        k_all = jnp.dot(h_all, wk_ref[...], preferred_element_type=jnp.float32)
        v_all = jnp.dot(h_all, wv_ref[...], preferred_element_type=jnp.float32)
        for hh in range(H):                                               # static unroll
            sl = slice(hh * D, (hh + 1) * D)
            k_scr[hh] = k_all[:, sl].astype(jnp.bfloat16)                 # (T_pad, D)
            v_scr[hh] = v_all[:, sl].astype(jnp.bfloat16)

        # ---- query tile: LN1 + Q projection (scale folded in), head-major ----
        xq = xq_ref[0].astype(jnp.float32)                                # (TQ, C)
        hq = _layer_norm(xq, ln1_g, ln1_b, eps).astype(jnp.bfloat16)
        qt = jnp.dot(hq, wq_ref[...], preferred_element_type=jnp.float32) * scale
        for hh in range(H):
            q_scr[hh] = qt[:, hh * D:(hh + 1) * D].astype(jnp.bfloat16)   # (TQ, D)

        # ---- flash-style online softmax over causal KV tiles (tiles > qi are skipped) ----
        m_scr[...] = jnp.full((H, TQ, 1), -jnp.inf, jnp.float32)
        l_scr[...] = jnp.zeros((H, TQ, 1), jnp.float32)
        acc_scr[...] = jnp.zeros((H, TQ, D), jnp.float32)

        @pl.loop(0, qi + 1)
        def _(j):
            k0 = pl.multiple_of(j * TQ, TQ)
            q3 = q_scr[...]                                               # (H, TQ, D)
            k3 = k_scr[:, pl.ds(k0, TQ), :]                               # (H, TQ, D)
            v3 = v_scr[:, pl.ds(k0, TQ), :]

            s = jnp.einsum("hqd,hkd->hqk", q3, k3,
                           preferred_element_type=jnp.float32)            # (H, TQ, TQ)
            rows = q0 + lax.broadcasted_iota(jnp.int32, (1, TQ, TQ), 1)
            cols = (j * TQ) + lax.broadcasted_iota(jnp.int32, (1, TQ, TQ), 2)
            s = jnp.where(rows >= cols, s, -jnp.inf)

            m_prev = m_scr[...]
            m_new = jnp.maximum(m_prev, jnp.max(s, axis=-1, keepdims=True))
            alpha = jnp.exp(m_prev - m_new)
            p = jnp.exp(s - m_new)
            l_scr[...] = alpha * l_scr[...] + jnp.sum(p, axis=-1, keepdims=True)
            pv = jnp.einsum("hqk,hkd->hqd", p.astype(jnp.bfloat16), v3,
                            preferred_element_type=jnp.float32)           # (H, TQ, D)
            acc_scr[...] = alpha * acc_scr[...] + pv
            m_scr[...] = m_new

        inv_l = pl.reciprocal(l_scr[...], approx=True)                    # (H, TQ, 1)
        acc_f = acc_scr[...]
        o_cat = jnp.concatenate([acc_f[hh] * inv_l[hh] for hh in range(H)],
                                axis=-1).astype(jnp.bfloat16)             # (TQ, C)

        # ---- output projection + residual ----
        attn = jnp.dot(o_cat, wo_ref[...],
                       preferred_element_type=jnp.float32) + bo_ref[0]
        x1 = xq + attn

        # ---- LN2 + MLP (Linear -> ReLU -> Linear) + residual ----
        g = _layer_norm(x1, ln2_g_ref[0], ln2_b_ref[0], eps).astype(jnp.bfloat16)
        f1 = jnp.dot(g, w1_ref[...], preferred_element_type=jnp.float32) + b1_ref[0]
        f1 = jnp.maximum(f1, 0.0).astype(jnp.bfloat16)
        f2 = jnp.dot(f1, w2_ref[...], preferred_element_type=jnp.float32) + b2_ref[0]

        out_ref[0] = (x1 + f2).astype(out_ref.dtype)

    return kernel


def transformer_block(x, params, *, num_heads, q_tile=256, eps=1e-5):
    """x: (B, T, C) float32.  params: dict of PyTorch-convention weights."""
    B, T, C = x.shape
    assert C % num_heads == 0
    D = C // num_heads
    F = 4 * C

    # Pad T to a multiple of the (8-aligned) query tile; padded rows are discarded at the end.
    TQ = min(q_tile, _round_up(T, 8))
    T_pad = _round_up(T, TQ)
    x_in = jnp.pad(x, ((0, 0), (0, T_pad - T), (0, 0))) if T_pad != T else x
    nq = T_pad // TQ

    bf16 = jnp.bfloat16
    # Pre-transpose Linear weights to (in, out) and cast MXU operands to bf16 (one-time, host side).
    wq_t = params["wq"].T.astype(bf16)   # (C, C)
    wk_t = params["wk"].T.astype(bf16)
    wv_t = params["wv"].T.astype(bf16)
    wo_t = params["wo"].T.astype(bf16)
    w1_t = params["w1"].T.astype(bf16)   # (C, F)
    w2_t = params["w2"].T.astype(bf16)   # (F, C)

    kernel = make_transformer_block_kernel(num_heads=num_heads, head_dim=D,
                                           q_tile=TQ, eps=eps)

    def const2d(shape):
        return pl.BlockSpec(shape, lambda b, q: (0, 0))

    # NOTE: for best lane utilization C should be a multiple of 128 (the C=32 demo below
    # is layout-inefficient but correct); for very large C on v7x (64 MiB VMEM), the
    # constant weight blocks should additionally be single-buffered / K-tiled.
    grid_spec = pltpu.PrefetchScalarGridSpec(
        num_scalar_prefetch=0,
        grid=(B, nq),
        in_specs=[
            pl.BlockSpec((1, T_pad, C), lambda b, q: (b, 0, 0)),   # x, full sequence (for K/V)
            pl.BlockSpec((1, TQ, C), lambda b, q: (b, q, 0)),      # x, query tile
            const2d((1, C)), const2d((1, C)),                      # ln1 gamma, beta
            const2d((C, C)), const2d((C, C)), const2d((C, C)),     # WqT, WkT, WvT (bf16)
            const2d((C, C)), const2d((1, C)),                      # WoT (bf16), bo
            const2d((1, C)), const2d((1, C)),                      # ln2 gamma, beta
            const2d((C, F)), const2d((1, F)),                      # W1T (bf16), b1
            const2d((F, C)), const2d((1, C)),                      # W2T (bf16), b2
        ],
        out_specs=pl.BlockSpec((1, TQ, C), lambda b, q: (b, q, 0)),
        scratch_shapes=[
            pltpu.VMEM((num_heads, T_pad, D), bf16),    # K, head-major
            pltpu.VMEM((num_heads, T_pad, D), bf16),    # V, head-major
            pltpu.VMEM((num_heads, TQ, D), bf16),       # Q tile, head-major
            pltpu.VMEM((num_heads, TQ, 1), jnp.float32),  # running max
            pltpu.VMEM((num_heads, TQ, 1), jnp.float32),  # running denom
            pltpu.VMEM((num_heads, TQ, D), jnp.float32),  # output accumulator
        ],
    )

    flops = int(B * (24 * T_pad * C * C + 4 * T_pad * T_pad * C))
    transcendentals = int(B * (num_heads * T_pad * T_pad + 4 * T_pad))
    bytes_accessed = int(2 * B * T_pad * C * 4 + 12 * C * C * 2 + 12 * C * 4)

    out = pl.pallas_call(
        kernel,
        out_shape=jax.ShapeDtypeStruct((B, T_pad, C), x.dtype),
        grid_spec=grid_spec,
        compiler_params=pltpu.CompilerParams(
            dimension_semantics=("parallel", "parallel"),
            vmem_limit_bytes=32 * 1024 * 1024,
        ),
        cost_estimate=pl.CostEstimate(flops=flops,
                                      transcendentals=transcendentals,
                                      bytes_accessed=bytes_accessed),
    )(x_in, x_in,
      params["ln1_g"], params["ln1_b"],
      wq_t, wk_t, wv_t, wo_t, params["bo"],
      params["ln2_g"], params["ln2_b"],
      w1_t, params["b1"], w2_t, params["b2"])

    return out[:, :T, :] if T_pad != T else out


def reference_block(x, params, *, num_heads, eps=1e-5):
    """Pure-JAX f32 reference mirroring the PyTorch forward pass."""
    B, T, C = x.shape
    D = C // num_heads

    def ln(v, g, b):
        mu = jnp.mean(v, axis=-1, keepdims=True)
        var = jnp.mean((v - mu) ** 2, axis=-1, keepdims=True)
        return (v - mu) / jnp.sqrt(var + eps) * g[0] + b[0]

    h = ln(x, params["ln1_g"], params["ln1_b"])
    Q = h @ params["wq"].T
    K = h @ params["wk"].T
    V = h @ params["wv"].T
    Q = Q.reshape(B, T, num_heads, D).transpose(0, 2, 1, 3)
    K = K.reshape(B, T, num_heads, D).transpose(0, 2, 1, 3)
    V = V.reshape(B, T, num_heads, D).transpose(0, 2, 1, 3)
    s = jnp.einsum("bhtd,bhsd->bhts", Q, K) / math.sqrt(D)
    tril = jnp.tril(jnp.ones((T, T), bool))
    s = jnp.where(tril, s, -jnp.inf)
    p = jax.nn.softmax(s, axis=-1)
    o = jnp.einsum("bhts,bhsd->bhtd", p, V)
    o = o.transpose(0, 2, 1, 3).reshape(B, T, C)
    attn = o @ params["wo"].T + params["bo"][0]
    x1 = x + attn
    g = ln(x1, params["ln2_g"], params["ln2_b"])
    f = jnp.maximum(g @ params["w1"].T + params["b1"][0], 0.0) @ params["w2"].T + params["b2"][0]
    return x1 + f


if __name__ == "__main__":
    B, T, C = 2, 8, 32
    num_heads = 4
    F = 4 * C

    key = jax.random.PRNGKey(0)
    ks = jax.random.split(key, 16)

    def w(k, shape, scale=0.05):
        return (scale * jax.random.normal(k, shape)).astype(jnp.float32)

    params = {
        "ln1_g": jnp.ones((1, C), jnp.float32),
        "ln1_b": jnp.zeros((1, C), jnp.float32),
        "wq": w(ks[0], (C, C)),
        "wk": w(ks[1], (C, C)),
        "wv": w(ks[2], (C, C)),
        "wo": w(ks[3], (C, C)),
        "bo": w(ks[4], (1, C)),
        "ln2_g": jnp.ones((1, C), jnp.float32),
        "ln2_b": jnp.zeros((1, C), jnp.float32),
        "w1": w(ks[5], (F, C)),
        "b1": w(ks[6], (1, F)),
        "w2": w(ks[7], (C, F)),
        "b2": w(ks[8], (1, C)),
    }

    x = jax.random.normal(ks[9], (B, T, C), dtype=jnp.float32)

    out = transformer_block(x, params, num_heads=num_heads)
    out = jax.block_until_ready(out)

    ref = reference_block(x, params, num_heads=num_heads)
    max_err = float(jnp.max(jnp.abs(out - ref)))
    # bf16 matmul inputs with f32 accumulation -> loosened tolerance vs pure-f32 reference.
    assert jnp.allclose(out, ref, atol=2e-2, rtol=2e-2), f"mismatch vs reference (max abs err {max_err})"

    print("KERNEL_OK")
</pallas_src>

<mosaic_0001>
module attributes {stable_mosaic.version = 11 : i64} {
  func.func @kernel(%arg0: i32, %arg1: i32, %arg2: memref<1x8x32xf32, #tpu.memory_space<vmem>>, %arg3: memref<1x8x32xf32, #tpu.memory_space<vmem>>, %arg4: memref<1x32xf32, #tpu.memory_space<vmem>>, %arg5: memref<1x32xf32, #tpu.memory_space<vmem>>, %arg6: memref<32x32xbf16, #tpu.memory_space<vmem>>, %arg7: memref<32x32xbf16, #tpu.memory_space<vmem>>, %arg8: memref<32x32xbf16, #tpu.memory_space<vmem>>, %arg9: memref<32x32xbf16, #tpu.memory_space<vmem>>, %arg10: memref<1x32xf32, #tpu.memory_space<vmem>>, %arg11: memref<1x32xf32, #tpu.memory_space<vmem>>, %arg12: memref<1x32xf32, #tpu.memory_space<vmem>>, %arg13: memref<32x128xbf16, #tpu.memory_space<vmem>>, %arg14: memref<1x128xf32, #tpu.memory_space<vmem>>, %arg15: memref<128x32xbf16, #tpu.memory_space<vmem>>, %arg16: memref<1x32xf32, #tpu.memory_space<vmem>>, %arg17: memref<1x8x32xf32, #tpu.memory_space<vmem>>, %arg18: memref<4x8x8xbf16, #tpu.memory_space<vmem>>, %arg19: memref<4x8x8xbf16, #tpu.memory_space<vmem>>, %arg20: memref<4x8x8xbf16, #tpu.memory_space<vmem>>, %arg21: memref<4x8x1xf32, #tpu.memory_space<vmem>>, %arg22: memref<4x8x1xf32, #tpu.memory_space<vmem>>, %arg23: memref<4x8x8xf32, #tpu.memory_space<vmem>>) attributes {dimension_semantics = [#tpu.dimension_semantics<parallel>, #tpu.dimension_semantics<parallel>], iteration_bounds = array<i64: 2, 1>, scalar_prefetch = 0 : i64, scratch_operands = 6 : i64, tpu.core_type = #tpu.core_type<tc>, window_params = [{transform_indices = @transform_0, window_bounds = array<i64: 1, 8, 32>}, {transform_indices = @transform_1, window_bounds = array<i64: 1, 8, 32>}, {pipeline_mode = #tpu.pipeline_mode<synchronous>, transform_indices = @transform_2, window_bounds = array<i64: 1, 32>}, {pipeline_mode = #tpu.pipeline_mode<synchronous>, transform_indices = @transform_3, window_bounds = array<i64: 1, 32>}, {pipeline_mode = #tpu.pipeline_mode<synchronous>, transform_indices = @transform_4, window_bounds = array<i64: 32, 32>}, {pipeline_mode = #tpu.pipeline_mode<synchronous>, transform_indices = @transform_5, window_bounds = array<i64: 32, 32>}, {pipeline_mode = #tpu.pipeline_mode<synchronous>, transform_indices = @transform_6, window_bounds = array<i64: 32, 32>}, {pipeline_mode = #tpu.pipeline_mode<synchronous>, transform_indices = @transform_7, window_bounds = array<i64: 32, 32>}, {pipeline_mode = #tpu.pipeline_mode<synchronous>, transform_indices = @transform_8, window_bounds = array<i64: 1, 32>}, {pipeline_mode = #tpu.pipeline_mode<synchronous>, transform_indices = @transform_9, window_bounds = array<i64: 1, 32>}, {pipeline_mode = #tpu.pipeline_mode<synchronous>, transform_indices = @transform_10, window_bounds = array<i64: 1, 32>}, {pipeline_mode = #tpu.pipeline_mode<synchronous>, transform_indices = @transform_11, window_bounds = array<i64: 32, 128>}, {pipeline_mode = #tpu.pipeline_mode<synchronous>, transform_indices = @transform_12, window_bounds = array<i64: 1, 128>}, {pipeline_mode = #tpu.pipeline_mode<synchronous>, transform_indices = @transform_13, window_bounds = array<i64: 128, 32>}, {pipeline_mode = #tpu.pipeline_mode<synchronous>, transform_indices = @transform_14, window_bounds = array<i64: 1, 32>}, {transform_indices = @transform_15, window_bounds = array<i64: 1, 8, 32>}]} {
    %c8_i32 = arith.constant 8 : i32
    %0 = arith.muli %arg1, %c8_i32 : i32
    %c0 = arith.constant 0 : index
    %c0_0 = arith.constant 0 : index
    %1 = vector.load %arg4[%c0, %c0_0] : memref<1x32xf32, #tpu.memory_space<vmem>>, vector<1x32xf32>
    %2 = vector.shape_cast %1 : vector<1x32xf32> to vector<32xf32>
    %c0_1 = arith.constant 0 : index
    %c0_2 = arith.constant 0 : index
    %3 = vector.load %arg5[%c0_1, %c0_2] : memref<1x32xf32, #tpu.memory_space<vmem>>, vector<1x32xf32>
    %4 = vector.shape_cast %3 : vector<1x32xf32> to vector<32xf32>
    %c0_3 = arith.constant 0 : index
    %c0_4 = arith.constant 0 : index
    %c0_5 = arith.constant 0 : index
    %5 = vector.load %arg2[%c0_3, %c0_4, %c0_5] : memref<1x8x32xf32, #tpu.memory_space<vmem>>, vector<1x8x32xf32>
    %6 = vector.shape_cast %5 : vector<1x8x32xf32> to vector<8x32xf32>
    %cst = arith.constant dense<0.000000e+00> : vector<8xf32>
    %7 = vector.multi_reduction <add>, %6, %cst [1] : vector<8x32xf32> to vector<8xf32>
    %8 = vector.shape_cast %7 : vector<8xf32> to vector<8x1xf32>
    %cst_6 = arith.constant 3.200000e+01 : f32
    %9 = vector.broadcast %cst_6 : f32 to vector<8x1xf32>
    %10 = arith.divf %8, %9 : vector<8x1xf32>
    %11 = vector.broadcast %10 : vector<8x1xf32> to vector<8x32xf32>
    %12 = arith.subf %6, %11 : vector<8x32xf32>
    %13 = vector.broadcast %10 : vector<8x1xf32> to vector<8x32xf32>
    %14 = arith.subf %6, %13 : vector<8x32xf32>
    %15 = arith.mulf %12, %14 : vector<8x32xf32>
    %cst_7 = arith.constant dense<0.000000e+00> : vector<8xf32>
    %16 = vector.multi_reduction <add>, %15, %cst_7 [1] : vector<8x32xf32> to vector<8xf32>
    %17 = vector.shape_cast %16 : vector<8xf32> to vector<8x1xf32>
    %cst_8 = arith.constant 3.200000e+01 : f32
    %18 = vector.broadcast %cst_8 : f32 to vector<8x1xf32>
    %19 = arith.divf %17, %18 : vector<8x1xf32>
    %20 = vector.broadcast %10 : vector<8x1xf32> to vector<8x32xf32>
    %21 = arith.subf %6, %20 : vector<8x32xf32>
    %cst_9 = arith.constant 9.99999974E-6 : f32
    %22 = vector.broadcast %cst_9 : f32 to vector<8x1xf32>
    %23 = arith.addf %19, %22 : vector<8x1xf32>
    %24 = math.rsqrt %23 : vector<8x1xf32>
    %25 = vector.broadcast %24 : vector<8x1xf32> to vector<8x32xf32>
    %26 = arith.mulf %21, %25 : vector<8x32xf32>
    %27 = vector.shape_cast %2 : vector<32xf32> to vector<1x32xf32>
    %28 = vector.broadcast %27 : vector<1x32xf32> to vector<8x32xf32>
    %29 = arith.mulf %26, %28 : vector<8x32xf32>
    %30 = vector.shape_cast %4 : vector<32xf32> to vector<1x32xf32>
    %31 = vector.broadcast %30 : vector<1x32xf32> to vector<8x32xf32>
    %32 = arith.addf %29, %31 : vector<8x32xf32>
    %33 = arith.truncf %32 : vector<8x32xf32> to vector<8x32xbf16>
    %c0_10 = arith.constant 0 : index
    %c0_11 = arith.constant 0 : index
    %34 = vector.load %arg7[%c0_10, %c0_11] : memref<32x32xbf16, #tpu.memory_space<vmem>>, vector<32x32xbf16>
    %cst_12 = arith.constant dense<0.000000e+00> : vector<8x32xf32>
    %35 = tpu.matmul %33, %34, %cst_12 {dimension_numbers = #tpu.dot_dimension_numbers<[1], [0], [0], [1], [0, 0, 1, 1], [], []>} : vector<8x32xbf16>, vector<32x32xbf16>, vector<8x32xf32> -> vector<8x32xf32>
    %c0_13 = arith.constant 0 : index
    %c0_14 = arith.constant 0 : index
    %36 = vector.load %arg8[%c0_13, %c0_14] : memref<32x32xbf16, #tpu.memory_space<vmem>>, vector<32x32xbf16>
    %cst_15 = arith.constant dense<0.000000e+00> : vector<8x32xf32>
    %37 = tpu.matmul %33, %36, %cst_15 {dimension_numbers = #tpu.dot_dimension_numbers<[1], [0], [0], [1], [0, 0, 1, 1], [], []>} : vector<8x32xbf16>, vector<32x32xbf16>, vector<8x32xf32> -> vector<8x32xf32>
    %38 = vector.extract_strided_slice %35 {offsets = [0, 0], sizes = [8, 8], strides = [1, 1]} : vector<8x32xf32> to vector<8x8xf32>
    %39 = arith.truncf %38 : vector<8x8xf32> to vector<8x8xbf16>
    %c0_16 = arith.constant 0 : index
    %c0_17 = arith.constant 0 : index
    %c0_18 = arith.constant 0 : index
    %40 = vector.load %arg18[%c0_16, %c0_17, %c0_18] : memref<4x8x8xbf16, #tpu.memory_space<vmem>>, vector<1x8x8xbf16>
    %41 = vector.shape_cast %40 : vector<1x8x8xbf16> to vector<8x8xbf16>
    %42 = vector.shape_cast %39 : vector<8x8xbf16> to vector<1x8x8xbf16>
    tpu.vector_store %arg18[%c0_16, %c0_17, %c0_18], %42 {strides = array<i32>} : memref<4x8x8xbf16, #tpu.memory_space<vmem>>, vector<1x8x8xbf16>,
    %43 = vector.extract_strided_slice %37 {offsets = [0, 0], sizes = [8, 8], strides = [1, 1]} : vector<8x32xf32> to vector<8x8xf32>
    %44 = arith.truncf %43 : vector<8x8xf32> to vector<8x8xbf16>
    %c0_19 = arith.constant 0 : index
    %c0_20 = arith.constant 0 : index
    %c0_21 = arith.constant 0 : index
    %45 = vector.load %arg19[%c0_19, %c0_20, %c0_21] : memref<4x8x8xbf16, #tpu.memory_space<vmem>>, vector<1x8x8xbf16>
    %46 = vector.shape_cast %45 : vector<1x8x8xbf16> to vector<8x8xbf16>
    %47 = vector.shape_cast %44 : vector<8x8xbf16> to vector<1x8x8xbf16>
    tpu.vector_store %arg19[%c0_19, %c0_20, %c0_21], %47 {strides = array<i32>} : memref<4x8x8xbf16, #tpu.memory_space<vmem>>, vector<1x8x8xbf16>,
    %48 = vector.extract_strided_slice %35 {offsets = [0, 8], sizes = [8, 8], strides = [1, 1]} : vector<8x32xf32> to vector<8x8xf32>
    %49 = arith.truncf %48 : vector<8x8xf32> to vector<8x8xbf16>
    %c1 = arith.constant 1 : index
    %c0_22 = arith.constant 0 : index
    %c0_23 = arith.constant 0 : index
    %50 = vector.load %arg18[%c1, %c0_22, %c0_23] : memref<4x8x8xbf16, #tpu.memory_space<vmem>>, vector<1x8x8xbf16>
    %51 = vector.shape_cast %50 : vector<1x8x8xbf16> to vector<8x8xbf16>
    %52 = vector.shape_cast %49 : vector<8x8xbf16> to vector<1x8x8xbf16>
    tpu.vector_store %arg18[%c1, %c0_22, %c0_23], %52 {strides = array<i32>} : memref<4x8x8xbf16, #tpu.memory_space<vmem>>, vector<1x8x8xbf16>,
    %53 = vector.extract_strided_slice %37 {offsets = [0, 8], sizes = [8, 8], strides = [1, 1]} : vector<8x32xf32> to vector<8x8xf32>
    %54 = arith.truncf %53 : vector<8x8xf32> to vector<8x8xbf16>
    %c1_24 = arith.constant 1 : index
    %c0_25 = arith.constant 0 : index
    %c0_26 = arith.constant 0 : index
    %55 = vector.load %arg19[%c1_24, %c0_25, %c0_26] : memref<4x8x8xbf16, #tpu.memory_space<vmem>>, vector<1x8x8xbf16>
    %56 = vector.shape_cast %55 : vector<1x8x8xbf16> to vector<8x8xbf16>
    %57 = vector.shape_cast %54 : vector<8x8xbf16> to vector<1x8x8xbf16>
    tpu.vector_store %arg19[%c1_24, %c0_25, %c0_26], %57 {strides = array<i32>} : memref<4x8x8xbf16, #tpu.memory_space<vmem>>, vector<1x8x8xbf16>,
    %58 = vector.extract_strided_slice %35 {offsets = [0, 16], sizes = [8, 8], strides = [1, 1]} : vector<8x32xf32> to vector<8x8xf32>
    %59 = arith.truncf %58 : vector<8x8xf32> to vector<8x8xbf16>
    %c2 = arith.constant 2 : index
    %c0_27 = arith.constant 0 : index
    %c0_28 = arith.constant 0 : index
    %60 = vector.load %arg18[%c2, %c0_27, %c0_28] : memref<4x8x8xbf16, #tpu.memory_space<vmem>>, vector<1x8x8xbf16>
    %61 = vector.shape_cast %60 : vector<1x8x8xbf16> to vector<8x8xbf16>
    %62 = vector.shape_cast %59 : vector<8x8xbf16> to vector<1x8x8xbf16>
    tpu.vector_store %arg18[%c2, %c0_27, %c0_28], %62 {strides = array<i32>} : memref<4x8x8xbf16, #tpu.memory_space<vmem>>, vector<1x8x8xbf16>,
    %63 = vector.extract_strided_slice %37 {offsets = [0, 16], sizes = [8, 8], strides = [1, 1]} : vector<8x32xf32> to vector<8x8xf32>
    %64 = arith.truncf %63 : vector<8x8xf32> to vector<8x8xbf16>
    %c2_29 = arith.constant 2 : index
    %c0_30 = arith.constant 0 : index
    %c0_31 = arith.constant 0 : index
    %65 = vector.load %arg19[%c2_29, %c0_30, %c0_31] : memref<4x8x8xbf16, #tpu.memory_space<vmem>>, vector<1x8x8xbf16>
    %66 = vector.shape_cast %65 : vector<1x8x8xbf16> to vector<8x8xbf16>
    %67 = vector.shape_cast %64 : vector<8x8xbf16> to vector<1x8x8xbf16>
    tpu.vector_store %arg19[%c2_29, %c0_30, %c0_31], %67 {strides = array<i32>} : memref<4x8x8xbf16, #tpu.memory_space<vmem>>, vector<1x8x8xbf16>,
    %68 = vector.extract_strided_slice %35 {offsets = [0, 24], sizes = [8, 8], strides = [1, 1]} : vector<8x32xf32> to vector<8x8xf32>
    %69 = arith.truncf %68 : vector<8x8xf32> to vector<8x8xbf16>
    %c3 = arith.constant 3 : index
    %c0_32 = arith.constant 0 : index
    %c0_33 = arith.constant 0 : index
    %70 = vector.load %arg18[%c3, %c0_32, %c0_33] : memref<4x8x8xbf16, #tpu.memory_space<vmem>>, vector<1x8x8xbf16>
    %71 = vector.shape_cast %70 : vector<1x8x8xbf16> to vector<8x8xbf16>
    %72 = vector.shape_cast %69 : vector<8x8xbf16> to vector<1x8x8xbf16>
    tpu.vector_store %arg18[%c3, %c0_32, %c0_33], %72 {strides = array<i32>} : memref<4x8x8xbf16, #tpu.memory_space<vmem>>, vector<1x8x8xbf16>,
    %73 = vector.extract_strided_slice %37 {offsets = [0, 24], sizes = [8, 8], strides = [1, 1]} : vector<8x32xf32> to vector<8x8xf32>
    %74 = arith.truncf %73 : vector<8x8xf32> to vector<8x8xbf16>
    %c3_34 = arith.constant 3 : index
    %c0_35 = arith.constant 0 : index
    %c0_36 = arith.constant 0 : index
    %75 = vector.load %arg19[%c3_34, %c0_35, %c0_36] : memref<4x8x8xbf16, #tpu.memory_space<vmem>>, vector<1x8x8xbf16>
    %76 = vector.shape_cast %75 : vector<1x8x8xbf16> to vector<8x8xbf16>
    %77 = vector.shape_cast %74 : vector<8x8xbf16> to vector<1x8x8xbf16>
    tpu.vector_store %arg19[%c3_34, %c0_35, %c0_36], %77 {strides = array<i32>} : memref<4x8x8xbf16, #tpu.memory_space<vmem>>, vector<1x8x8xbf16>,
    %c0_37 = arith.constant 0 : index
    %c0_38 = arith.constant 0 : index
    %c0_39 = arith.constant 0 : index
    %78 = vector.load %arg3[%c0_37, %c0_38, %c0_39] : memref<1x8x32xf32, #tpu.memory_space<vmem>>, vector<1x8x32xf32>
    %79 = vector.shape_cast %78 : vector<1x8x32xf32> to vector<8x32xf32>
    %cst_40 = arith.constant dense<0.000000e+00> : vector<8xf32>
    %80 = vector.multi_reduction <add>, %79, %cst_40 [1] : vector<8x32xf32> to vector<8xf32>
    %81 = vector.shape_cast %80 : vector<8xf32> to vector<8x1xf32>
    %cst_41 = arith.constant 3.200000e+01 : f32
    %82 = vector.broadcast %cst_41 : f32 to vector<8x1xf32>
    %83 = arith.divf %81, %82 : vector<8x1xf32>
    %84 = vector.broadcast %83 : vector<8x1xf32> to vector<8x32xf32>
    %85 = arith.subf %79, %84 : vector<8x32xf32>
    %86 = vector.broadcast %83 : vector<8x1xf32> to vector<8x32xf32>
    %87 = arith.subf %79, %86 : vector<8x32xf32>
    %88 = arith.mulf %85, %87 : vector<8x32xf32>
    %cst_42 = arith.constant dense<0.000000e+00> : vector<8xf32>
    %89 = vector.multi_reduction <add>, %88, %cst_42 [1] : vector<8x32xf32> to vector<8xf32>
    %90 = vector.shape_cast %89 : vector<8xf32> to vector<8x1xf32>
    %cst_43 = arith.constant 3.200000e+01 : f32
    %91 = vector.broadcast %cst_43 : f32 to vector<8x1xf32>
    %92 = arith.divf %90, %91 : vector<8x1xf32>
    %93 = vector.broadcast %83 : vector<8x1xf32> to vector<8x32xf32>
    %94 = arith.subf %79, %93 : vector<8x32xf32>
    %cst_44 = arith.constant 9.99999974E-6 : f32
    %95 = vector.broadcast %cst_44 : f32 to vector<8x1xf32>
    %96 = arith.addf %92, %95 : vector<8x1xf32>
    %97 = math.rsqrt %96 : vector<8x1xf32>
    %98 = vector.broadcast %97 : vector<8x1xf32> to vector<8x32xf32>
    %99 = arith.mulf %94, %98 : vector<8x32xf32>
    %100 = vector.shape_cast %2 : vector<32xf32> to vector<1x32xf32>
    %101 = vector.broadcast %100 : vector<1x32xf32> to vector<8x32xf32>
    %102 = arith.mulf %99, %101 : vector<8x32xf32>
    %103 = vector.shape_cast %4 : vector<32xf32> to vector<1x32xf32>
    %104 = vector.broadcast %103 : vector<1x32xf32> to vector<8x32xf32>
    %105 = arith.addf %102, %104 : vector<8x32xf32>
    %106 = arith.truncf %105 : vector<8x32xf32> to vector<8x32xbf16>
    %c0_45 = arith.constant 0 : index
    %c0_46 = arith.constant 0 : index
    %107 = vector.load %arg6[%c0_45, %c0_46] : memref<32x32xbf16, #tpu.memory_space<vmem>>, vector<32x32xbf16>
    %cst_47 = arith.constant dense<0.000000e+00> : vector<8x32xf32>
    %108 = tpu.matmul %106, %107, %cst_47 {dimension_numbers = #tpu.dot_dimension_numbers<[1], [0], [0], [1], [0, 0, 1, 1], [], []>} : vector<8x32xbf16>, vector<32x32xbf16>, vector<8x32xf32> -> vector<8x32xf32>
    %cst_48 = arith.constant 0.353553385 : f32
    %109 = vector.broadcast %cst_48 : f32 to vector<8x32xf32>
    %110 = arith.mulf %108, %109 : vector<8x32xf32>
    %111 = vector.extract_strided_slice %110 {offsets = [0, 0], sizes = [8, 8], strides = [1, 1]} : vector<8x32xf32> to vector<8x8xf32>
    %112 = arith.truncf %111 : vector<8x8xf32> to vector<8x8xbf16>
    %c0_49 = arith.constant 0 : index
    %c0_50 = arith.constant 0 : index
    %c0_51 = arith.constant 0 : index
    %113 = vector.load %arg20[%c0_49, %c0_50, %c0_51] : memref<4x8x8xbf16, #tpu.memory_space<vmem>>, vector<1x8x8xbf16>
    %114 = vector.shape_cast %113 : vector<1x8x8xbf16> to vector<8x8xbf16>
    %115 = vector.shape_cast %112 : vector<8x8xbf16> to vector<1x8x8xbf16>
    tpu.vector_store %arg20[%c0_49, %c0_50, %c0_51], %115 {strides = array<i32>} : memref<4x8x8xbf16, #tpu.memory_space<vmem>>, vector<1x8x8xbf16>,
    %116 = vector.extract_strided_slice %110 {offsets = [0, 8], sizes = [8, 8], strides = [1, 1]} : vector<8x32xf32> to vector<8x8xf32>
    %117 = arith.truncf %116 : vector<8x8xf32> to vector<8x8xbf16>
    %c1_52 = arith.constant 1 : index
    %c0_53 = arith.constant 0 : index
    %c0_54 = arith.constant 0 : index
    %118 = vector.load %arg20[%c1_52, %c0_53, %c0_54] : memref<4x8x8xbf16, #tpu.memory_space<vmem>>, vector<1x8x8xbf16>
    %119 = vector.shape_cast %118 : vector<1x8x8xbf16> to vector<8x8xbf16>
    %120 = vector.shape_cast %117 : vector<8x8xbf16> to vector<1x8x8xbf16>
    tpu.vector_store %arg20[%c1_52, %c0_53, %c0_54], %120 {strides = array<i32>} : memref<4x8x8xbf16, #tpu.memory_space<vmem>>, vector<1x8x8xbf16>,
    %121 = vector.extract_strided_slice %110 {offsets = [0, 16], sizes = [8, 8], strides = [1, 1]} : vector<8x32xf32> to vector<8x8xf32>
    %122 = arith.truncf %121 : vector<8x8xf32> to vector<8x8xbf16>
    %c2_55 = arith.constant 2 : index
    %c0_56 = arith.constant 0 : index
    %c0_57 = arith.constant 0 : index
    %123 = vector.load %arg20[%c2_55, %c0_56, %c0_57] : memref<4x8x8xbf16, #tpu.memory_space<vmem>>, vector<1x8x8xbf16>
    %124 = vector.shape_cast %123 : vector<1x8x8xbf16> to vector<8x8xbf16>
    %125 = vector.shape_cast %122 : vector<8x8xbf16> to vector<1x8x8xbf16>
    tpu.vector_store %arg20[%c2_55, %c0_56, %c0_57], %125 {strides = array<i32>} : memref<4x8x8xbf16, #tpu.memory_space<vmem>>, vector<1x8x8xbf16>,
    %126 = vector.extract_strided_slice %110 {offsets = [0, 24], sizes = [8, 8], strides = [1, 1]} : vector<8x32xf32> to vector<8x8xf32>
    %127 = arith.truncf %126 : vector<8x8xf32> to vector<8x8xbf16>
    %c3_58 = arith.constant 3 : index
    %c0_59 = arith.constant 0 : index
    %c0_60 = arith.constant 0 : index
    %128 = vector.load %arg20[%c3_58, %c0_59, %c0_60] : memref<4x8x8xbf16, #tpu.memory_space<vmem>>, vector<1x8x8xbf16>
    %129 = vector.shape_cast %128 : vector<1x8x8xbf16> to vector<8x8xbf16>
    %130 = vector.shape_cast %127 : vector<8x8xbf16> to vector<1x8x8xbf16>
    tpu.vector_store %arg20[%c3_58, %c0_59, %c0_60], %130 {strides = array<i32>} : memref<4x8x8xbf16, #tpu.memory_space<vmem>>, vector<1x8x8xbf16>,
    %cst_61 = arith.constant 0xFF800000 : f32
    %131 = vector.broadcast %cst_61 : f32 to vector<4x8x1xf32>
    %c0_62 = arith.constant 0 : index
    %c0_63 = arith.constant 0 : index
    %c0_64 = arith.constant 0 : index
    %132 = vector.load %arg21[%c0_62, %c0_63, %c0_64] : memref<4x8x1xf32, #tpu.memory_space<vmem>>, vector<4x8x1xf32>
    tpu.vector_store %arg21[%c0_62, %c0_63, %c0_64], %131 {strides = array<i32>} : memref<4x8x1xf32, #tpu.memory_space<vmem>>, vector<4x8x1xf32>,
    %cst_65 = arith.constant 0.000000e+00 : f32
    %133 = vector.broadcast %cst_65 : f32 to vector<4x8x1xf32>
    %c0_66 = arith.constant 0 : index
    %c0_67 = arith.constant 0 : index
    %c0_68 = arith.constant 0 : index
    %134 = vector.load %arg22[%c0_66, %c0_67, %c0_68] : memref<4x8x1xf32, #tpu.memory_space<vmem>>, vector<4x8x1xf32>
    tpu.vector_store %arg22[%c0_66, %c0_67, %c0_68], %133 {strides = array<i32>} : memref<4x8x1xf32, #tpu.memory_space<vmem>>, vector<4x8x1xf32>,
    %cst_69 = arith.constant 0.000000e+00 : f32
    %135 = vector.broadcast %cst_69 : f32 to vector<4x8x8xf32>
    %c0_70 = arith.constant 0 : index
    %c0_71 = arith.constant 0 : index
    %c0_72 = arith.constant 0 : index
    %136 = vector.load %arg23[%c0_70, %c0_71, %c0_72] : memref<4x8x8xf32, #tpu.memory_space<vmem>>, vector<4x8x8xf32>
    tpu.vector_store %arg23[%c0_70, %c0_71, %c0_72], %135 {strides = array<i32>} : memref<4x8x8xf32, #tpu.memory_space<vmem>>, vector<4x8x8xf32>,
    %c1_i32 = arith.constant 1 : i32
    %137 = arith.addi %arg1, %c1_i32 : i32
    %c0_i32 = arith.constant 0 : i32
    %138 = arith.subi %137, %c0_i32 : i32
    %c1_i32_73 = arith.constant 1 : i32
    %c1_i32_74 = arith.constant 1 : i32
    %139 = arith.subi %c1_i32_73, %c1_i32_74 : i32
    %140 = arith.addi %138, %139 : i32
    %c1_i32_75 = arith.constant 1 : i32
    %141 = arith.divsi %140, %c1_i32_75 : i32
    %c1_i32_76 = arith.constant 1 : i32
    %c0_i32_77 = arith.constant 0 : i32
    %c0_i32_78 = arith.constant 0 : i32
    %142 = arith.subi %141, %c0_i32_78 : i32
    %143 = arith.addi %c0_i32_78, %142 : i32
    %c1_i32_79 = arith.constant 1 : i32
    scf.for %arg24 = %c0_i32_78 to %143 step %c1_i32_79  : i32 {
      %233 = arith.muli %arg24, %c1_i32_76 : i32
      %234 = arith.addi %c0_i32_77, %233 : i32
      %c8_i32_114 = arith.constant 8 : i32
      %235 = arith.muli %234, %c8_i32_114 : i32
      %236 = tpu.assume_multiple %235, 8 : i32
      %c0_115 = arith.constant 0 : index
      %c0_116 = arith.constant 0 : index
      %c0_117 = arith.constant 0 : index
      %237 = vector.load %arg20[%c0_115, %c0_116, %c0_117] : memref<4x8x8xbf16, #tpu.memory_space<vmem>>, vector<4x8x8xbf16>
      %c0_118 = arith.constant 0 : index
      %238 = arith.index_cast %236 : i32 to index
      %c0_119 = arith.constant 0 : index
      %239 = vector.load %arg18[%c0_118, %238, %c0_119] : memref<4x8x8xbf16, #tpu.memory_space<vmem>>, vector<4x8x8xbf16>
      %c0_120 = arith.constant 0 : index
      %240 = arith.index_cast %236 : i32 to index
      %c0_121 = arith.constant 0 : index
      %241 = vector.load %arg19[%c0_120, %240, %c0_121] : memref<4x8x8xbf16, #tpu.memory_space<vmem>>, vector<4x8x8xbf16>
      "tpu.trace_start"() <{level = 10 : i32, message = "hqd,hkd->hqk"}> : () -> ()
      %cst_122 = arith.constant dense<0.000000e+00> : vector<4x8x8xf32>
      %242 = tpu.matmul %237, %239, %cst_122 {dimension_numbers = #tpu.dot_dimension_numbers<[2], [2], [1], [1], [0, 0, 0, 1, 1, 1], [0], [0]>} : vector<4x8x8xbf16>, vector<4x8x8xbf16>, vector<4x8x8xf32> -> vector<4x8x8xf32>
      "tpu.trace_stop"() : () -> ()
      %243 = tpu.iota {dimensions = array<i32: 1>} : vector<1x8x8xi32>
      %244 = vector.broadcast %0 : i32 to vector<1x8x8xi32>
      %245 = arith.addi %244, %243 : vector<1x8x8xi32>
      %c8_i32_123 = arith.constant 8 : i32
      %246 = arith.muli %234, %c8_i32_123 : i32
      %247 = tpu.iota {dimensions = array<i32: 2>} : vector<1x8x8xi32>
      %248 = vector.broadcast %246 : i32 to vector<1x8x8xi32>
      %249 = arith.addi %248, %247 : vector<1x8x8xi32>
      %250 = arith.cmpi sge, %245, %249 : vector<1x8x8xi32>
      %cst_124 = arith.constant 0xFF800000 : f32
      %251 = vector.shape_cast %250 : vector<1x8x8xi1> to vector<1x8x8xi1>
      %252 = vector.broadcast %251 : vector<1x8x8xi1> to vector<4x8x8xi1>
      %253 = vector.broadcast %cst_124 : f32 to vector<4x8x8xf32>
      %254 = arith.select %252, %242, %253 : vector<4x8x8xi1>, vector<4x8x8xf32>
      %c0_125 = arith.constant 0 : index
      %c0_126 = arith.constant 0 : index
      %c0_127 = arith.constant 0 : index
      %255 = vector.load %arg21[%c0_125, %c0_126, %c0_127] : memref<4x8x1xf32, #tpu.memory_space<vmem>>, vector<4x8x1xf32>
      %cst_128 = arith.constant dense<0xFF800000> : vector<4x8xf32>
      %256 = vector.multi_reduction <maximumf>, %254, %cst_128 [2] : vector<4x8x8xf32> to vector<4x8xf32>
      %257 = vector.shape_cast %256 : vector<4x8xf32> to vector<4x8x1xf32>
      %258 = arith.maximumf %255, %257 : vector<4x8x1xf32>
      %259 = arith.subf %255, %258 : vector<4x8x1xf32>
      %260 = math.exp %259 : vector<4x8x1xf32>
      %261 = vector.broadcast %258 : vector<4x8x1xf32> to vector<4x8x8xf32>
      %262 = arith.subf %254, %261 : vector<4x8x8xf32>
      %263 = math.exp %262 : vector<4x8x8xf32>
      %c0_129 = arith.constant 0 : index
      %c0_130 = arith.constant 0 : index
      %c0_131 = arith.constant 0 : index
      %264 = vector.load %arg22[%c0_129, %c0_130, %c0_131] : memref<4x8x1xf32, #tpu.memory_space<vmem>>, vector<4x8x1xf32>
      %265 = arith.mulf %260, %264 : vector<4x8x1xf32>
      %cst_132 = arith.constant dense<0.000000e+00> : vector<4x8xf32>
      %266 = vector.multi_reduction <add>, %263, %cst_132 [2] : vector<4x8x8xf32> to vector<4x8xf32>
      %267 = vector.shape_cast %266 : vector<4x8xf32> to vector<4x8x1xf32>
      %268 = arith.addf %265, %267 : vector<4x8x1xf32>
      %c0_133 = arith.constant 0 : index
      %c0_134 = arith.constant 0 : index
      %c0_135 = arith.constant 0 : index
      %269 = vector.load %arg22[%c0_133, %c0_134, %c0_135] : memref<4x8x1xf32, #tpu.memory_space<vmem>>, vector<4x8x1xf32>
      tpu.vector_store %arg22[%c0_133, %c0_134, %c0_135], %268 {strides = array<i32>} : memref<4x8x1xf32, #tpu.memory_space<vmem>>, vector<4x8x1xf32>,
      %270 = arith.truncf %263 : vector<4x8x8xf32> to vector<4x8x8xbf16>
      "tpu.trace_start"() <{level = 10 : i32, message = "hqk,hkd->hqd"}> : () -> ()
      %cst_136 = arith.constant dense<0.000000e+00> : vector<4x8x8xf32>
      %271 = tpu.matmul %270, %241, %cst_136 {dimension_numbers = #tpu.dot_dimension_numbers<[2], [1], [1], [2], [0, 0, 0, 1, 1, 2], [0], [0]>} : vector<4x8x8xbf16>, vector<4x8x8xbf16>, vector<4x8x8xf32> -> vector<4x8x8xf32>
      "tpu.trace_stop"() : () -> ()
      %c0_137 = arith.constant 0 : index
      %c0_138 = arith.constant 0 : index
      %c0_139 = arith.constant 0 : index
      %272 = vector.load %arg23[%c0_137, %c0_138, %c0_139] : memref<4x8x8xf32, #tpu.memory_space<vmem>>, vector<4x8x8xf32>
      %273 = vector.broadcast %260 : vector<4x8x1xf32> to vector<4x8x8xf32>
      %274 = arith.mulf %273, %272 : vector<4x8x8xf32>
      %275 = arith.addf %274, %271 : vector<4x8x8xf32>
      %c0_140 = arith.constant 0 : index
      %c0_141 = arith.constant 0 : index
      %c0_142 = arith.constant 0 : index
      %276 = vector.load %arg23[%c0_140, %c0_141, %c0_142] : memref<4x8x8xf32, #tpu.memory_space<vmem>>, vector<4x8x8xf32>
      tpu.vector_store %arg23[%c0_140, %c0_141, %c0_142], %275 {strides = array<i32>} : memref<4x8x8xf32, #tpu.memory_space<vmem>>, vector<4x8x8xf32>,
      %c0_143 = arith.constant 0 : index
      %c0_144 = arith.constant 0 : index
      %c0_145 = arith.constant 0 : index
      %277 = vector.load %arg21[%c0_143, %c0_144, %c0_145] : memref<4x8x1xf32, #tpu.memory_space<vmem>>, vector<4x8x1xf32>
      tpu.vector_store %arg21[%c0_143, %c0_144, %c0_145], %258 {strides = array<i32>} : memref<4x8x1xf32, #tpu.memory_space<vmem>>, vector<4x8x1xf32>,
    }
    %c0_80 = arith.constant 0 : index
    %c0_81 = arith.constant 0 : index
    %c0_82 = arith.constant 0 : index
    %144 = vector.load %arg22[%c0_80, %c0_81, %c0_82] : memref<4x8x1xf32, #tpu.memory_space<vmem>>, vector<4x8x1xf32>
    %145 = tpu.reciprocal %144 {approx = true} : vector<4x8x1xf32> -> vector<4x8x1xf32>
    %c0_83 = arith.constant 0 : index
    %c0_84 = arith.constant 0 : index
    %c0_85 = arith.constant 0 : index
    %146 = vector.load %arg23[%c0_83, %c0_84, %c0_85] : memref<4x8x8xf32, #tpu.memory_space<vmem>>, vector<4x8x8xf32>
    %147 = vector.extract_strided_slice %146 {offsets = [0, 0, 0], sizes = [1, 8, 8], strides = [1, 1, 1]} : vector<4x8x8xf32> to vector<1x8x8xf32>
    %148 = vector.shape_cast %147 : vector<1x8x8xf32> to vector<8x8xf32>
    %149 = vector.extract_strided_slice %145 {offsets = [0, 0, 0], sizes = [1, 8, 1], strides = [1, 1, 1]} : vector<4x8x1xf32> to vector<1x8x1xf32>
    %150 = vector.shape_cast %149 : vector<1x8x1xf32> to vector<8x1xf32>
    %151 = vector.broadcast %150 : vector<8x1xf32> to vector<8x8xf32>
    %152 = arith.mulf %148, %151 : vector<8x8xf32>
    %153 = vector.extract_strided_slice %146 {offsets = [1, 0, 0], sizes = [1, 8, 8], strides = [1, 1, 1]} : vector<4x8x8xf32> to vector<1x8x8xf32>
    %154 = vector.shape_cast %153 : vector<1x8x8xf32> to vector<8x8xf32>
    %155 = vector.extract_strided_slice %145 {offsets = [1, 0, 0], sizes = [1, 8, 1], strides = [1, 1, 1]} : vector<4x8x1xf32> to vector<1x8x1xf32>
    %156 = vector.shape_cast %155 : vector<1x8x1xf32> to vector<8x1xf32>
    %157 = vector.broadcast %156 : vector<8x1xf32> to vector<8x8xf32>
    %158 = arith.mulf %154, %157 : vector<8x8xf32>
    %159 = vector.extract_strided_slice %146 {offsets = [2, 0, 0], sizes = [1, 8, 8], strides = [1, 1, 1]} : vector<4x8x8xf32> to vector<1x8x8xf32>
    %160 = vector.shape_cast %159 : vector<1x8x8xf32> to vector<8x8xf32>
    %161 = vector.extract_strided_slice %145 {offsets = [2, 0, 0], sizes = [1, 8, 1], strides = [1, 1, 1]} : vector<4x8x1xf32> to vector<1x8x1xf32>
    %162 = vector.shape_cast %161 : vector<1x8x1xf32> to vector<8x1xf32>
    %163 = vector.broadcast %162 : vector<8x1xf32> to vector<8x8xf32>
    %164 = arith.mulf %160, %163 : vector<8x8xf32>
    %165 = vector.extract_strided_slice %146 {offsets = [3, 0, 0], sizes = [1, 8, 8], strides = [1, 1, 1]} : vector<4x8x8xf32> to vector<1x8x8xf32>
    %166 = vector.shape_cast %165 : vector<1x8x8xf32> to vector<8x8xf32>
    %167 = vector.extract_strided_slice %145 {offsets = [3, 0, 0], sizes = [1, 8, 1], strides = [1, 1, 1]} : vector<4x8x1xf32> to vector<1x8x1xf32>
    %168 = vector.shape_cast %167 : vector<1x8x1xf32> to vector<8x1xf32>
    %169 = vector.broadcast %168 : vector<8x1xf32> to vector<8x8xf32>
    %170 = arith.mulf %166, %169 : vector<8x8xf32>
    %171 = tpu.concatenate %152, %158, %164, %170 in 1 : vector<8x8xf32>, vector<8x8xf32>, vector<8x8xf32>, vector<8x8xf32> -> vector<8x32xf32>
    %172 = arith.truncf %171 : vector<8x32xf32> to vector<8x32xbf16>
    %c0_86 = arith.constant 0 : index
    %c0_87 = arith.constant 0 : index
    %173 = vector.load %arg9[%c0_86, %c0_87] : memref<32x32xbf16, #tpu.memory_space<vmem>>, vector<32x32xbf16>
    %cst_88 = arith.constant dense<0.000000e+00> : vector<8x32xf32>
    %174 = tpu.matmul %172, %173, %cst_88 {dimension_numbers = #tpu.dot_dimension_numbers<[1], [0], [0], [1], [0, 0, 1, 1], [], []>} : vector<8x32xbf16>, vector<32x32xbf16>, vector<8x32xf32> -> vector<8x32xf32>
    %c0_89 = arith.constant 0 : index
    %c0_90 = arith.constant 0 : index
    %175 = vector.load %arg10[%c0_89, %c0_90] : memref<1x32xf32, #tpu.memory_space<vmem>>, vector<1x32xf32>
    %176 = vector.shape_cast %175 : vector<1x32xf32> to vector<32xf32>
    %177 = vector.shape_cast %176 : vector<32xf32> to vector<1x32xf32>
    %178 = vector.broadcast %177 : vector<1x32xf32> to vector<8x32xf32>
    %179 = arith.addf %174, %178 : vector<8x32xf32>
    %180 = arith.addf %79, %179 : vector<8x32xf32>
    %c0_91 = arith.constant 0 : index
    %c0_92 = arith.constant 0 : index
    %181 = vector.load %arg11[%c0_91, %c0_92] : memref<1x32xf32, #tpu.memory_space<vmem>>, vector<1x32xf32>
    %182 = vector.shape_cast %181 : vector<1x32xf32> to vector<32xf32>
    %c0_93 = arith.constant 0 : index
    %c0_94 = arith.constant 0 : index
    %183 = vector.load %arg12[%c0_93, %c0_94] : memref<1x32xf32, #tpu.memory_space<vmem>>, vector<1x32xf32>
    %184 = vector.shape_cast %183 : vector<1x32xf32> to vector<32xf32>
    %cst_95 = arith.constant dense<0.000000e+00> : vector<8xf32>
    %185 = vector.multi_reduction <add>, %180, %cst_95 [1] : vector<8x32xf32> to vector<8xf32>
    %186 = vector.shape_cast %185 : vector<8xf32> to vector<8x1xf32>
    %cst_96 = arith.constant 3.200000e+01 : f32
    %187 = vector.broadcast %cst_96 : f32 to vector<8x1xf32>
    %188 = arith.divf %186, %187 : vector<8x1xf32>
    %189 = vector.broadcast %188 : vector<8x1xf32> to vector<8x32xf32>
    %190 = arith.subf %180, %189 : vector<8x32xf32>
    %191 = vector.broadcast %188 : vector<8x1xf32> to vector<8x32xf32>
    %192 = arith.subf %180, %191 : vector<8x32xf32>
    %193 = arith.mulf %190, %192 : vector<8x32xf32>
    %cst_97 = arith.constant dense<0.000000e+00> : vector<8xf32>
    %194 = vector.multi_reduction <add>, %193, %cst_97 [1] : vector<8x32xf32> to vector<8xf32>
    %195 = vector.shape_cast %194 : vector<8xf32> to vector<8x1xf32>
    %cst_98 = arith.constant 3.200000e+01 : f32
    %196 = vector.broadcast %cst_98 : f32 to vector<8x1xf32>
    %197 = arith.divf %195, %196 : vector<8x1xf32>
    %198 = vector.broadcast %188 : vector<8x1xf32> to vector<8x32xf32>
    %199 = arith.subf %180, %198 : vector<8x32xf32>
    %cst_99 = arith.constant 9.99999974E-6 : f32
    %200 = vector.broadcast %cst_99 : f32 to vector<8x1xf32>
    %201 = arith.addf %197, %200 : vector<8x1xf32>
    %202 = math.rsqrt %201 : vector<8x1xf32>
    %203 = vector.broadcast %202 : vector<8x1xf32> to vector<8x32xf32>
    %204 = arith.mulf %199, %203 : vector<8x32xf32>
    %205 = vector.shape_cast %182 : vector<32xf32> to vector<1x32xf32>
    %206 = vector.broadcast %205 : vector<1x32xf32> to vector<8x32xf32>
    %207 = arith.mulf %204, %206 : vector<8x32xf32>
    %208 = vector.shape_cast %184 : vector<32xf32> to vector<1x32xf32>
    %209 = vector.broadcast %208 : vector<1x32xf32> to vector<8x32xf32>
    %210 = arith.addf %207, %209 : vector<8x32xf32>
    %211 = arith.truncf %210 : vector<8x32xf32> to vector<8x32xbf16>
    %c0_100 = arith.constant 0 : index
    %c0_101 = arith.constant 0 : index
    %212 = vector.load %arg13[%c0_100, %c0_101] : memref<32x128xbf16, #tpu.memory_space<vmem>>, vector<32x128xbf16>
    %cst_102 = arith.constant dense<0.000000e+00> : vector<8x128xf32>
    %213 = tpu.matmul %211, %212, %cst_102 {dimension_numbers = #tpu.dot_dimension_numbers<[1], [0], [0], [1], [0, 0, 1, 1], [], []>} : vector<8x32xbf16>, vector<32x128xbf16>, vector<8x128xf32> -> vector<8x128xf32>
    %c0_103 = arith.constant 0 : index
    %c0_104 = arith.constant 0 : index
    %214 = vector.load %arg14[%c0_103, %c0_104] : memref<1x128xf32, #tpu.memory_space<vmem>>, vector<1x128xf32>
    %215 = vector.shape_cast %214 : vector<1x128xf32> to vector<128xf32>
    %216 = vector.shape_cast %215 : vector<128xf32> to vector<1x128xf32>
    %217 = vector.broadcast %216 : vector<1x128xf32> to vector<8x128xf32>
    %218 = arith.addf %213, %217 : vector<8x128xf32>
    %cst_105 = arith.constant 0.000000e+00 : f32
    %219 = vector.broadcast %cst_105 : f32 to vector<8x128xf32>
    %220 = arith.maximumf %218, %219 : vector<8x128xf32>
    %221 = arith.truncf %220 : vector<8x128xf32> to vector<8x128xbf16>
    %c0_106 = arith.constant 0 : index
    %c0_107 = arith.constant 0 : index
    %222 = vector.load %arg15[%c0_106, %c0_107] : memref<128x32xbf16, #tpu.memory_space<vmem>>, vector<128x32xbf16>
    %cst_108 = arith.constant dense<0.000000e+00> : vector<8x32xf32>
    %223 = tpu.matmul %221, %222, %cst_108 {dimension_numbers = #tpu.dot_dimension_numbers<[1], [0], [0], [1], [0, 0, 1, 1], [], []>} : vector<8x128xbf16>, vector<128x32xbf16>, vector<8x32xf32> -> vector<8x32xf32>
    %c0_109 = arith.constant 0 : index
    %c0_110 = arith.constant 0 : index
    %224 = vector.load %arg16[%c0_109, %c0_110] : memref<1x32xf32, #tpu.memory_space<vmem>>, vector<1x32xf32>
    %225 = vector.shape_cast %224 : vector<1x32xf32> to vector<32xf32>
    %226 = vector.shape_cast %225 : vector<32xf32> to vector<1x32xf32>
    %227 = vector.broadcast %226 : vector<1x32xf32> to vector<8x32xf32>
    %228 = arith.addf %223, %227 : vector<8x32xf32>
    %229 = arith.addf %180, %228 : vector<8x32xf32>
    %c0_111 = arith.constant 0 : index
    %c0_112 = arith.constant 0 : index
    %c0_113 = arith.constant 0 : index
    %230 = vector.load %arg17[%c0_111, %c0_112, %c0_113] : memref<1x8x32xf32, #tpu.memory_space<vmem>>, vector<1x8x32xf32>
    %231 = vector.shape_cast %230 : vector<1x8x32xf32> to vector<8x32xf32>
    %232 = vector.shape_cast %229 : vector<8x32xf32> to vector<1x8x32xf32>
    tpu.vector_store %arg17[%c0_111, %c0_112, %c0_113], %232 {strides = array<i32>} : memref<1x8x32xf32, #tpu.memory_space<vmem>>, vector<1x8x32xf32>,
    return
  }
  func.func @transform_0(%arg0: i32, %arg1: i32) -> (i32, i32, i32) {
    %c0_i32 = arith.constant 0 : i32
    %c0_i32_0 = arith.constant 0 : i32
    %c0_i32_1 = arith.constant 0 : i32
    return %arg0, %c0_i32, %c0_i32_0 : i32, i32, i32
  }
  func.func @transform_1(%arg0: i32, %arg1: i32) -> (i32, i32, i32) {
    %c0_i32 = arith.constant 0 : i32
    %c0_i32_0 = arith.constant 0 : i32
    return %arg0, %arg1, %c0_i32 : i32, i32, i32
  }
  func.func @transform_2(%arg0: i32, %arg1: i32) -> (i32, i32) {
    %c0_i32 = arith.constant 0 : i32
    %c0_i32_0 = arith.constant 0 : i32
    %c0_i32_1 = arith.constant 0 : i32
    return %c0_i32, %c0_i32_0 : i32, i32
  }
  func.func @transform_3(%arg0: i32, %arg1: i32) -> (i32, i32) {
    %c0_i32 = arith.constant 0 : i32
    %c0_i32_0 = arith.constant 0 : i32
    %c0_i32_1 = arith.constant 0 : i32
    return %c0_i32, %c0_i32_0 : i32, i32
  }
  func.func @transform_4(%arg0: i32, %arg1: i32) -> (i32, i32) {
    %c0_i32 = arith.constant 0 : i32
    %c0_i32_0 = arith.constant 0 : i32
    %c0_i32_1 = arith.constant 0 : i32
    return %c0_i32, %c0_i32_0 : i32, i32
  }
  func.func @transform_5(%arg0: i32, %arg1: i32) -> (i32, i32) {
    %c0_i32 = arith.constant 0 : i32
    %c0_i32_0 = arith.constant 0 : i32
    %c0_i32_1 = arith.constant 0 : i32
    return %c0_i32, %c0_i32_0 : i32, i32
  }
  func.func @transform_6(%arg0: i32, %arg1: i32) -> (i32, i32) {
    %c0_i32 = arith.constant 0 : i32
    %c0_i32_0 = arith.constant 0 : i32
    %c0_i32_1 = arith.constant 0 : i32
    return %c0_i32, %c0_i32_0 : i32, i32
  }
  func.func @transform_7(%arg0: i32, %arg1: i32) -> (i32, i32) {
    %c0_i32 = arith.constant 0 : i32
    %c0_i32_0 = arith.constant 0 : i32
    %c0_i32_1 = arith.constant 0 : i32
    return %c0_i32, %c0_i32_0 : i32, i32
  }
  func.func @transform_8(%arg0: i32, %arg1: i32) -> (i32, i32) {
    %c0_i32 = arith.constant 0 : i32
    %c0_i32_0 = arith.constant 0 : i32
    %c0_i32_1 = arith.constant 0 : i32
    return %c0_i32, %c0_i32_0 : i32, i32
  }
  func.func @transform_9(%arg0: i32, %arg1: i32) -> (i32, i32) {
    %c0_i32 = arith.constant 0 : i32
    %c0_i32_0 = arith.constant 0 : i32
    %c0_i32_1 = arith.constant 0 : i32
    return %c0_i32, %c0_i32_0 : i32, i32
  }
  func.func @transform_10(%arg0: i32, %arg1: i32) -> (i32, i32) {
    %c0_i32 = arith.constant 0 : i32
    %c0_i32_0 = arith.constant 0 : i32
    %c0_i32_1 = arith.constant 0 : i32
    return %c0_i32, %c0_i32_0 : i32, i32
  }
  func.func @transform_11(%arg0: i32, %arg1: i32) -> (i32, i32) {
    %c0_i32 = arith.constant 0 : i32
    %c0_i32_0 = arith.constant 0 : i32
    %c0_i32_1 = arith.constant 0 : i32
    return %c0_i32, %c0_i32_0 : i32, i32
  }
  func.func @transform_12(%arg0: i32, %arg1: i32) -> (i32, i32) {
    %c0_i32 = arith.constant 0 : i32
    %c0_i32_0 = arith.constant 0 : i32
    %c0_i32_1 = arith.constant 0 : i32
    return %c0_i32, %c0_i32_0 : i32, i32
  }
  func.func @transform_13(%arg0: i32, %arg1: i32) -> (i32, i32) {
    %c0_i32 = arith.constant 0 : i32
    %c0_i32_0 = arith.constant 0 : i32
    %c0_i32_1 = arith.constant 0 : i32
    return %c0_i32, %c0_i32_0 : i32, i32
  }
  func.func @transform_14(%arg0: i32, %arg1: i32) -> (i32, i32) {
    %c0_i32 = arith.constant 0 : i32
    %c0_i32_0 = arith.constant 0 : i32
    %c0_i32_1 = arith.constant 0 : i32
    return %c0_i32, %c0_i32_0 : i32, i32
  }
  func.func @transform_15(%arg0: i32, %arg1: i32) -> (i32, i32, i32) {
    %c0_i32 = arith.constant 0 : i32
    %c0_i32_0 = arith.constant 0 : i32
    return %arg0, %arg1, %c0_i32 : i32, i32, i32
  }
}

</mosaic_0001>

<llo_original>
// kernel: tpu_custom_call.1
$region0: #{tpu_custom_call.1}
  #allocation0 [shape = 'u32[]', space=smem, size = 0x4, offset = 0x4, fixed_abs, tag = 'smem constant byte address 0x4 - core index']
  #allocation1 [shape = 'u32[72,128]{1,0:T(1,128)}', space=vmem, size = 0x9000, scoped, tag = 'internal scratch']
  #allocation2 [shape = 'bf16[4,8,8]{2,1,0:T(8,128)(2,1)}', space=vmem, size = 0x2000, scoped, tag = 'scratch operand']
  #allocation3 [shape = 'bf16[4,8,8]{2,1,0:T(8,128)(2,1)}', space=vmem, size = 0x2000, scoped, tag = 'scratch operand']
  #allocation4 [shape = 'bf16[4,8,8]{2,1,0:T(8,128)(2,1)}', space=vmem, size = 0x2000, scoped, tag = 'scratch operand']
  #allocation5 [shape = 'f32[4,8,1]{2,1,0:T(8,128)}', space=vmem, size = 0x4000, scoped, tag = 'scratch operand']
  #allocation6 [shape = 'f32[4,8,1]{2,1,0:T(8,128)}', space=vmem, size = 0x4000, scoped, tag = 'scratch operand']
  #allocation7 [shape = 'f32[4,8,8]{2,1,0:T(8,128)}', space=vmem, size = 0x4000, scoped, tag = 'scratch operand']
  %s0 = inlined_call_operand.vmem [shape: f32[2,8,32], index: 0, kind: input, shape index: {}]
  %s1 = inlined_call_operand.vmem [shape: f32[2,8,32], index: 1, kind: input, shape index: {}]
  %s2 = inlined_call_operand.vmem [shape: f32[1,32], index: 2, kind: input, shape index: {}]
  %s3 = inlined_call_operand.vmem [shape: f32[1,32], index: 3, kind: input, shape index: {}]
  %s4 = inlined_call_operand.vmem [shape: bf16[32,32], index: 4, kind: input, shape index: {}]
  %s5 = inlined_call_operand.vmem [shape: bf16[32,32], index: 5, kind: input, shape index: {}]
  %s6 = inlined_call_operand.vmem [shape: bf16[32,32], index: 6, kind: input, shape index: {}]
  %s7 = inlined_call_operand.hbm [shape: bf16[32,32], index: 7, kind: input, shape index: {}]
  %s8 = inlined_call_operand.vmem [shape: f32[1,32], index: 8, kind: input, shape index: {}]
  %s9 = inlined_call_operand.vmem [shape: f32[1,32], index: 9, kind: input, shape index: {}]
  %s10 = inlined_call_operand.vmem [shape: f32[1,32], index: 10, kind: input, shape index: {}]
  %s11 = inlined_call_operand.hbm [shape: bf16[32,128], index: 11, kind: input, shape index: {}]
  %s12 = inlined_call_operand.vmem [shape: f32[1,128], index: 12, kind: input, shape index: {}]
  %s13 = inlined_call_operand.vmem [shape: bf16[128,32], index: 13, kind: input, shape index: {}]
  %s14 = inlined_call_operand.vmem [shape: f32[1,32], index: 14, kind: input, shape index: {}]
  %s15 = inlined_call_operand.hbm [shape: f32[2,8,32], index: 15, kind: output, shape index: {}]
  %s16 = sld [smem:[#allocation0]]
  $region108: #{tpu_custom_call.1} parent=0
    _
  %s18 = ssub.s32 1, %s16
  %s19 = scalar_select 0, %s18, %s16
  $region1: #{tpu_custom_call.1} parent=0
    #allocation8 [shape = 'u8[8192]{0}', space=vmem, size = 0x2000, scoped, tag = 'input window, operand 7, single buffered']
    #allocation9 [shape = 's32[2]{0}', space=sflag, size = 0x8, scoped, tag = 'scoped memory for tpu_custom_call.1']
    #allocation10 [shape = 's32[2]{0}', space=sflag, size = 0x8, scoped, tag = 'scoped memory for tpu_custom_call.1']
    #allocation11 [shape = 'u8[8192]{0}', space=vmem, size = 0x2000, scoped, tag = 'input window, operand 11, single buffered']
    #allocation12 [shape = 's32[1]{0}', space=sflag, size = 0x4, scoped, tag = 'scoped memory for tpu_custom_call.1']
    #allocation13 [shape = 'u8[8192]{0}', space=vmem, size = 0x2000, scoped, tag = 'output window, operand 0']
    %20 = vsyncpa [#allocation9], 0
    %21 = vsyncpa [#allocation12], 0
    %22 = vsyncpa [#allocation10], 0
    %s23 = scalar_lea.sflag [#allocation10], 1
    %24 = vsyncpa %s23, 0
    loop: start=0, step=1, limit=4
    $region2: #{tpu_custom_call.1} parent=1 // loop_pre_header
      _
    $region3: #{tpu_custom_call.1} parent=1 // loop_header
      %s26 = sphi 0, %s30
      %p27 = scmp.ge.s32.totalorder %s26, 4
      %s33 = sphi 0, %s45
      %s34 = sphi 0, %s41
      %s35 = sphi 0, %s33
      %s36 = sphi 0, %s34
      %s37 = sphi 0, %s35
      %s38 = sphi 0, %s36
      %s48 = sphi 0, %s50
      %s51 = sphi 0, %s48
      %s52 = sphi 0, %s51
      %s68 = sphi 0, %s52
      %s76 = sphi 0, %s78
      %s79 = sphi 0, %s76
      %s80 = sphi 0, %s79
      %s96 = sphi 0, %s80
      %s100 = sphi 0, %s100
      %s102 = sphi 0, %s100
      %s103 = sphi 0, %s102
      %s117 = sphi 0, %s103
      %s121 = sphi 0, %s121
      %s123 = sphi 0, %s121
      %s124 = sphi 0, %s123
      %s138 = sphi 0, %s124
      %s142 = sphi 0, %s142
      %s144 = sphi 0, %s142
      %s145 = sphi 0, %s144
      %s159 = sphi 0, %s145
      %s163 = sphi 0, %s163
      %s165 = sphi 0, %s163
      %s166 = sphi 0, %s165
      %s180 = sphi 0, %s166
      %s184 = sphi 0, %s184
      %s186 = sphi 0, %s184
      %s187 = sphi 0, %s186
      %s201 = sphi 0, %s187
      %s205 = sphi 0, %s205
      %s207 = sphi 0, %s205
      %s208 = sphi 0, %s207
      %s222 = sphi 0, %s208
      %s226 = sphi 0, %s226
      %s228 = sphi 0, %s226
      %s229 = sphi 0, %s228
      %s243 = sphi 0, %s229
      %s247 = sphi 0, %s247
      %s249 = sphi 0, %s247
      %s250 = sphi 0, %s249
      %s264 = sphi 0, %s250
      %s268 = sphi 0, %s268
      %s270 = sphi 0, %s268
      %s271 = sphi 0, %s270
      %s285 = sphi 0, %s271
      %s289 = sphi 0, %s289
      %s291 = sphi 0, %s289
      %s292 = sphi 0, %s291
      %s306 = sphi 0, %s292
      %s310 = sphi 0, %s310
      %s312 = sphi 0, %s310
      %s313 = sphi 0, %s312
      %s327 = sphi 0, %s313
      %s331 = sphi 0, %s331
      %s333 = sphi 0, %s331
      %s334 = sphi 0, %s333
      %s348 = sphi 0, %s334
      %s352 = sphi 0, %s352
      %s354 = sphi 0, %s352
      %s355 = sphi 0, %s354
      %s369 = sphi 0, %s355
      %s377 = sphi 0, %s379
      %s380 = sphi 0, %s377
      %s381 = sphi 0, %s380
      %s397 = sphi 0, %s381
    $region4: #{tpu_custom_call.1} parent=1 // loop_header_branch
      %29 = sbr.rel (%p27) target = $region8
    $region5: #{tpu_custom_call.1} parent=1 // loop_body
      %s31 = ssub.s32 %s26, 1
      %s32 = ssub.s32 %s26, 2
      %s39 = sadd.s32 1, %s34
      %p40 = scmp.ge.s32.totalorder %s39, 1
      %s41 = scalar_select %p40, 0, %s39
      %s42 = sadd.s32 1, %s33
      %s43 = scalar_select %p40, %s42, %s33
      %p44 = scmp.ge.s32.totalorder %s43, 2
      %s45 = scalar_select %p44, 0, %s43
      %s46 = ssub.s32 %s33, %s45
      %p47 = scmp.eq.s32.totalorder %s46, 0
      %s49 = sadd.s32 %s48, 1
      %s50 = scalar_select %p47, %s48, %s49
      %p53 = pneg %p47
      %p54 = scmp.eq.s32.totalorder %s26, 1
      %p55 = por %p53, %p54
      %p56 = scmp.ne.s32.totalorder %s48, %s51
      %p57 = scmp.eq.s32.totalorder %s26, 0
      %p58 = por %p56, %p57
      %p59 = scmp.ne.s32.totalorder %s48, %s51
      %p60 = scmp.eq.s32.totalorder %s31, 1
      %p61 = por %p59, %p60
      %p62 = scmp.ne.s32.totalorder %s51, %s52
      %p63 = scmp.eq.s32.totalorder %s31, 0
      %p64 = por %p62, %p63
      %p65 = scmp.ne.s32.totalorder %s51, %s52
      %p66 = scmp.eq.s32.totalorder %s32, 1
      %p67 = por %p65, %p66
      %p69 = scmp.ne.s32.totalorder %s52, %s68
      %p70 = scmp.eq.s32.totalorder %s32, 0
      %p71 = por %p69, %p70
      %s72 = ssub.s32 %s33, %s45
      %s73 = ssub.s32 %s34, %s41
      %s74 = sor.u32 %s72, %s73
      %p75 = scmp.eq.s32.totalorder %s74, 0
      %s77 = sadd.s32 %s76, 1
      %s78 = scalar_select %p75, %s76, %s77
      %p81 = pneg %p75
      %p82 = scmp.eq.s32.totalorder %s26, 1
      %p83 = por %p81, %p82
      %p84 = scmp.ne.s32.totalorder %s76, %s79
      %p85 = scmp.eq.s32.totalorder %s26, 0
      %p86 = por %p84, %p85
      %p87 = scmp.ne.s32.totalorder %s76, %s79
      %p88 = scmp.eq.s32.totalorder %s31, 1
      %p89 = por %p87, %p88
      %p90 = scmp.ne.s32.totalorder %s79, %s80
      %p91 = scmp.eq.s32.totalorder %s31, 0
      %p92 = por %p90, %p91
      %p93 = scmp.ne.s32.totalorder %s79, %s80
      %p94 = scmp.eq.s32.totalorder %s32, 1
      %p95 = por %p93, %p94
      %p97 = scmp.ne.s32.totalorder %s80, %s96
      %p98 = scmp.eq.s32.totalorder %s32, 0
      %p99 = por %p97, %p98
      %s101 = sadd.s32 %s100, 1
      %p104 = scmp.eq.s32.totalorder %s26, 1
      %p105 = scmp.ne.s32.totalorder %s100, %s102
      %p106 = scmp.eq.s32.totalorder %s26, 0
      %p107 = por %p105, %p106
      %p108 = scmp.ne.s32.totalorder %s100, %s102
      %p109 = scmp.eq.s32.totalorder %s31, 1
      %p110 = por %p108, %p109
      %p111 = scmp.ne.s32.totalorder %s102, %s103
      %p112 = scmp.eq.s32.totalorder %s31, 0
      %p113 = por %p111, %p112
      %p114 = scmp.ne.s32.totalorder %s102, %s103
      %p115 = scmp.eq.s32.totalorder %s32, 1
      %p116 = por %p114, %p115
      %p118 = scmp.ne.s32.totalorder %s103, %s117
      %p119 = scmp.eq.s32.totalorder %s32, 0
      %p120 = por %p118, %p119
      %s122 = sadd.s32 %s121, 1
      %p125 = scmp.eq.s32.totalorder %s26, 1
      %p126 = scmp.ne.s32.totalorder %s121, %s123
      %p127 = scmp.eq.s32.totalorder %s26, 0
      %p128 = por %p126, %p127
      %p129 = scmp.ne.s32.totalorder %s121, %s123
      %p130 = scmp.eq.s32.totalorder %s31, 1
      %p131 = por %p129, %p130
      %p132 = scmp.ne.s32.totalorder %s123, %s124
      %p133 = scmp.eq.s32.totalorder %s31, 0
      %p134 = por %p132, %p133
      %p135 = scmp.ne.s32.totalorder %s123, %s124
      %p136 = scmp.eq.s32.totalorder %s32, 1
      %p137 = por %p135, %p136
      %p139 = scmp.ne.s32.totalorder %s124, %s138
      %p140 = scmp.eq.s32.totalorder %s32, 0
      %p141 = por %p139, %p140
      %s143 = sadd.s32 %s142, 1
      %p146 = scmp.eq.s32.totalorder %s26, 1
      %p147 = scmp.ne.s32.totalorder %s142, %s144
      %p148 = scmp.eq.s32.totalorder %s26, 0
      %p149 = por %p147, %p148
      %p150 = scmp.ne.s32.totalorder %s142, %s144
      %p151 = scmp.eq.s32.totalorder %s31, 1
      %p152 = por %p150, %p151
      %p153 = scmp.ne.s32.totalorder %s144, %s145
      %p154 = scmp.eq.s32.totalorder %s31, 0
      %p155 = por %p153, %p154
      %p156 = scmp.ne.s32.totalorder %s144, %s145
      %p157 = scmp.eq.s32.totalorder %s32, 1
      %p158 = por %p156, %p157
      %p160 = scmp.ne.s32.totalorder %s145, %s159
      %p161 = scmp.eq.s32.totalorder %s32, 0
      %p162 = por %p160, %p161
      %s164 = sadd.s32 %s163, 1
      %p167 = scmp.eq.s32.totalorder %s26, 1
      %p168 = scmp.ne.s32.totalorder %s163, %s165
      %p169 = scmp.eq.s32.totalorder %s26, 0
      %p170 = por %p168, %p169
      %p171 = scmp.ne.s32.totalorder %s163, %s165
      %p172 = scmp.eq.s32.totalorder %s31, 1
      %p173 = por %p171, %p172
      %p174 = scmp.ne.s32.totalorder %s165, %s166
      %p175 = scmp.eq.s32.totalorder %s31, 0
      %p176 = por %p174, %p175
      %p177 = scmp.ne.s32.totalorder %s165, %s166
      %p178 = scmp.eq.s32.totalorder %s32, 1
      %p179 = por %p177, %p178
      %p181 = scmp.ne.s32.totalorder %s166, %s180
      %p182 = scmp.eq.s32.totalorder %s32, 0
      %p183 = por %p181, %p182
      %s185 = sadd.s32 %s184, 1
      %p188 = scmp.eq.s32.totalorder %s26, 1
      %p189 = scmp.ne.s32.totalorder %s184, %s186
      %p190 = scmp.eq.s32.totalorder %s26, 0
      %p191 = por %p189, %p190
      %p192 = scmp.ne.s32.totalorder %s184, %s186
      %p193 = scmp.eq.s32.totalorder %s31, 1
      %p194 = por %p192, %p193
      %p195 = scmp.ne.s32.totalorder %s186, %s187
      %p196 = scmp.eq.s32.totalorder %s31, 0
      %p197 = por %p195, %p196
      %p198 = scmp.ne.s32.totalorder %s186, %s187
      %p199 = scmp.eq.s32.totalorder %s32, 1
      %p200 = por %p198, %p199
      %p202 = scmp.ne.s32.totalorder %s187, %s201
      %p203 = scmp.eq.s32.totalorder %s32, 0
      %p204 = por %p202, %p203
      %s206 = sadd.s32 %s205, 1
      %p209 = scmp.eq.s32.totalorder %s26, 1
      %p210 = scmp.ne.s32.totalorder %s205, %s207
      %p211 = scmp.eq.s32.totalorder %s26, 0
      %p212 = por %p210, %p211
      %p213 = scmp.ne.s32.totalorder %s205, %s207
      %p214 = scmp.eq.s32.totalorder %s31, 1
      %p215 = por %p213, %p214
      %p216 = scmp.ne.s32.totalorder %s207, %s208
      %p217 = scmp.eq.s32.totalorder %s31, 0
      %p218 = por %p216, %p217
      %p219 = scmp.ne.s32.totalorder %s207, %s208
      %p220 = scmp.eq.s32.totalorder %s32, 1
      %p221 = por %p219, %p220
      %p223 = scmp.ne.s32.totalorder %s208, %s222
      %p224 = scmp.eq.s32.totalorder %s32, 0
      %p225 = por %p223, %p224
      %s227 = sadd.s32 %s226, 1
      %p230 = scmp.eq.s32.totalorder %s26, 1
      %p231 = scmp.ne.s32.totalorder %s226, %s228
      %p232 = scmp.eq.s32.totalorder %s26, 0
      %p233 = por %p231, %p232
      %p234 = scmp.ne.s32.totalorder %s226, %s228
      %p235 = scmp.eq.s32.totalorder %s31, 1
      %p236 = por %p234, %p235
      %p237 = scmp.ne.s32.totalorder %s228, %s229
      %p238 = scmp.eq.s32.totalorder %s31, 0
      %p239 = por %p237, %p238
      %p240 = scmp.ne.s32.totalorder %s228, %s229
      %p241 = scmp.eq.s32.totalorder %s32, 1
      %p242 = por %p240, %p241
      %p244 = scmp.ne.s32.totalorder %s229, %s243
      %p245 = scmp.eq.s32.totalorder %s32, 0
      %p246 = por %p244, %p245
      %s248 = sadd.s32 %s247, 1
      %p251 = scmp.eq.s32.totalorder %s26, 1
      %p252 = scmp.ne.s32.totalorder %s247, %s249
      %p253 = scmp.eq.s32.totalorder %s26, 0
      %p254 = por %p252, %p253
      %p255 = scmp.ne.s32.totalorder %s247, %s249
      %p256 = scmp.eq.s32.totalorder %s31, 1
      %p257 = por %p255, %p256
      %p258 = scmp.ne.s32.totalorder %s249, %s250
      %p259 = scmp.eq.s32.totalorder %s31, 0
      %p260 = por %p258, %p259
      %p261 = scmp.ne.s32.totalorder %s249, %s250
      %p262 = scmp.eq.s32.totalorder %s32, 1
      %p263 = por %p261, %p262
      %p265 = scmp.ne.s32.totalorder %s250, %s264
      %p266 = scmp.eq.s32.totalorder %s32, 0
      %p267 = por %p265, %p266
      %s269 = sadd.s32 %s268, 1
      %p272 = scmp.eq.s32.totalorder %s26, 1
      %p273 = scmp.ne.s32.totalorder %s268, %s270
      %p274 = scmp.eq.s32.totalorder %s26, 0
      %p275 = por %p273, %p274
      %p276 = scmp.ne.s32.totalorder %s268, %s270
      %p277 = scmp.eq.s32.totalorder %s31, 1
      %p278 = por %p276, %p277
      %p279 = scmp.ne.s32.totalorder %s270, %s271
      %p280 = scmp.eq.s32.totalorder %s31, 0
      %p281 = por %p279, %p280
      %p282 = scmp.ne.s32.totalorder %s270, %s271
      %p283 = scmp.eq.s32.totalorder %s32, 1
      %p284 = por %p282, %p283
      %p286 = scmp.ne.s32.totalorder %s271, %s285
      %p287 = scmp.eq.s32.totalorder %s32, 0
      %p288 = por %p286, %p287
      %s290 = sadd.s32 %s289, 1
      %p293 = scmp.eq.s32.totalorder %s26, 1
      %p294 = scmp.ne.s32.totalorder %s289, %s291
      %p295 = scmp.eq.s32.totalorder %s26, 0
      %p296 = por %p294, %p295
      %p297 = scmp.ne.s32.totalorder %s289, %s291
      %p298 = scmp.eq.s32.totalorder %s31, 1
      %p299 = por %p297, %p298
      %p300 = scmp.ne.s32.totalorder %s291, %s292
      %p301 = scmp.eq.s32.totalorder %s31, 0
      %p302 = por %p300, %p301
      %p303 = scmp.ne.s32.totalorder %s291, %s292
      %p304 = scmp.eq.s32.totalorder %s32, 1
      %p305 = por %p303, %p304
      %p307 = scmp.ne.s32.totalorder %s292, %s306
      %p308 = scmp.eq.s32.totalorder %s32, 0
      %p309 = por %p307, %p308
      %s311 = sadd.s32 %s310, 1
      %p314 = scmp.eq.s32.totalorder %s26, 1
      %p315 = scmp.ne.s32.totalorder %s310, %s312
      %p316 = scmp.eq.s32.totalorder %s26, 0
      %p317 = por %p315, %p316
      %p318 = scmp.ne.s32.totalorder %s310, %s312
      %p319 = scmp.eq.s32.totalorder %s31, 1
      %p320 = por %p318, %p319
      %p321 = scmp.ne.s32.totalorder %s312, %s313
      %p322 = scmp.eq.s32.totalorder %s31, 0
      %p323 = por %p321, %p322
      %p324 = scmp.ne.s32.totalorder %s312, %s313
      %p325 = scmp.eq.s32.totalorder %s32, 1
      %p326 = por %p324, %p325
      %p328 = scmp.ne.s32.totalorder %s313, %s327
      %p329 = scmp.eq.s32.totalorder %s32, 0
      %p330 = por %p328, %p329
      %s332 = sadd.s32 %s331, 1
      %p335 = scmp.eq.s32.totalorder %s26, 1
      %p336 = scmp.ne.s32.totalorder %s331, %s333
      %p337 = scmp.eq.s32.totalorder %s26, 0
      %p338 = por %p336, %p337
      %p339 = scmp.ne.s32.totalorder %s331, %s333
      %p340 = scmp.eq.s32.totalorder %s31, 1
      %p341 = por %p339, %p340
      %p342 = scmp.ne.s32.totalorder %s333, %s334
      %p343 = scmp.eq.s32.totalorder %s31, 0
      %p344 = por %p342, %p343
      %p345 = scmp.ne.s32.totalorder %s333, %s334
      %p346 = scmp.eq.s32.totalorder %s32, 1
      %p347 = por %p345, %p346
      %p349 = scmp.ne.s32.totalorder %s334, %s348
      %p350 = scmp.eq.s32.totalorder %s32, 0
      %p351 = por %p349, %p350
      %s353 = sadd.s32 %s352, 1
      %p356 = scmp.eq.s32.totalorder %s26, 1
      %p357 = scmp.ne.s32.totalorder %s352, %s354
      %p358 = scmp.eq.s32.totalorder %s26, 0
      %p359 = por %p357, %p358
      %p360 = scmp.ne.s32.totalorder %s352, %s354
      %p361 = scmp.eq.s32.totalorder %s31, 1
      %p362 = por %p360, %p361
      %p363 = scmp.ne.s32.totalorder %s354, %s355
      %p364 = scmp.eq.s32.totalorder %s31, 0
      %p365 = por %p363, %p364
      %p366 = scmp.ne.s32.totalorder %s354, %s355
      %p367 = scmp.eq.s32.totalorder %s32, 1
      %p368 = por %p366, %p367
      %p370 = scmp.ne.s32.totalorder %s355, %s369
      %p371 = scmp.eq.s32.totalorder %s32, 0
      %p372 = por %p370, %p371
      %s373 = ssub.s32 %s33, %s45
      %s374 = ssub.s32 %s34, %s41
      %s375 = sor.u32 %s373, %s374
      %p376 = scmp.eq.s32.totalorder %s375, 0
      %s378 = sadd.s32 %s377, 1
      %s379 = scalar_select %p376, %s377, %s378
      %p382 = pneg %p376
      %p383 = scmp.eq.s32.totalorder %s26, 1
      %p384 = por %p382, %p383
      %p385 = scmp.ne.s32.totalorder %s377, %s380
      %p386 = scmp.eq.s32.totalorder %s26, 0
      %p387 = por %p385, %p386
      %p388 = scmp.ne.s32.totalorder %s377, %s380
      %p389 = scmp.eq.s32.totalorder %s31, 1
      %p390 = por %p388, %p389
      %p391 = scmp.ne.s32.totalorder %s380, %s381
      %p392 = scmp.eq.s32.totalorder %s31, 0
      %p393 = por %p391, %p392
      %p394 = scmp.ne.s32.totalorder %s380, %s381
      %p395 = scmp.eq.s32.totalorder %s32, 1
      %p396 = por %p394, %p395
      %p398 = scmp.ne.s32.totalorder %s381, %s397
      %p399 = scmp.eq.s32.totalorder %s32, 0
      %p400 = por %p398, %p399
      %p401 = scmp.le.s32.totalorder 1, %s26
      %p402 = scmp.lt.s32.totalorder %s26, 3
      %p403 = pnand %p401, %p402
      %p404 = pneg %p403
      // Predicated region
      $region9: #{tpu_custom_call.1} parent=5 // pred_check
        _
      $region10: #{tpu_custom_call.1} parent=5 // pred_check_branch
        %406 = sbr.rel (%p403) target = $region12
      $region11: #{tpu_custom_call.1} parent=5 // pred_region
        %s407 = ssub.s32 %s26, 1
        // Predicated region
        $region13: #{tpu_custom_call.1} parent=11 // pred_check
          %p408 = pneg %p113
        $region14: #{tpu_custom_call.1} parent=11 // pred_check_branch
          %410 = sbr.rel (%p408) target = $region16
        $region15: #{tpu_custom_call.1} parent=11 // pred_region
          _
        $region16: #{tpu_custom_call.1} parent=11 // pred_fallthru
          _
        // Predicated region
        $region17: #{tpu_custom_call.1} parent=11 // pred_check
          %p411 = pneg %p134
        $region18: #{tpu_custom_call.1} parent=11 // pred_check_branch
          %413 = sbr.rel (%p411) target = $region20
        $region19: #{tpu_custom_call.1} parent=11 // pred_region
          _
        $region20: #{tpu_custom_call.1} parent=11 // pred_fallthru
          _
        // Predicated region
        $region21: #{tpu_custom_call.1} parent=11 // pred_check
          %p414 = pneg %p155
        $region22: #{tpu_custom_call.1} parent=11 // pred_check_branch
          %416 = sbr.rel (%p414) target = $region24
        $region23: #{tpu_custom_call.1} parent=11 // pred_region
          _
        $region24: #{tpu_custom_call.1} parent=11 // pred_fallthru
          _
        // Predicated region
        $region25: #{tpu_custom_call.1} parent=11 // pred_check
          %p417 = pneg %p176
        $region26: #{tpu_custom_call.1} parent=11 // pred_check_branch
          %419 = sbr.rel (%p417) target = $region28
        $region27: #{tpu_custom_call.1} parent=11 // pred_region
          _
        $region28: #{tpu_custom_call.1} parent=11 // pred_fallthru
          _
        // Predicated region
        $region29: #{tpu_custom_call.1} parent=11 // pred_check
          %p420 = pneg %p197
        $region30: #{tpu_custom_call.1} parent=11 // pred_check_branch
          %422 = sbr.rel (%p420) target = $region32
        $region31: #{tpu_custom_call.1} parent=11 // pred_region
          _
        $region32: #{tpu_custom_call.1} parent=11 // pred_fallthru
          _
        // Predicated region
        $region33: #{tpu_custom_call.1} parent=11 // pred_check
          %p423 = pneg %p218
        $region34: #{tpu_custom_call.1} parent=11 // pred_check_branch
          %425 = sbr.rel (%p423) target = $region36
        $region35: #{tpu_custom_call.1} parent=11 // pred_region
          %427 = vsyncadd [#allocation9], 0
          %s428 = sshll.u32 %s7, 4
          %s429 = int_to_ptr.hbm [resolvable:$true] %s428
          %s430 = sshll.u32 [#allocation8], 4
          %s431 = int_to_ptr.vmem [resolvable:$true] %s430
          %436 = dma.hbm_to_vmem [thread:$0]  %s429, 256, %s431, [#allocation9], 64, 64, 4
        $region36: #{tpu_custom_call.1} parent=11 // pred_fallthru
          _
        // Predicated region
        $region37: #{tpu_custom_call.1} parent=11 // pred_check
          %p437 = pneg %p239
        $region38: #{tpu_custom_call.1} parent=11 // pred_check_branch
          %439 = sbr.rel (%p437) target = $region40
        $region39: #{tpu_custom_call.1} parent=11 // pred_region
          _
        $region40: #{tpu_custom_call.1} parent=11 // pred_fallthru
          _
        // Predicated region
        $region41: #{tpu_custom_call.1} parent=11 // pred_check
          %p440 = pneg %p260
        $region42: #{tpu_custom_call.1} parent=11 // pred_check_branch
          %442 = sbr.rel (%p440) target = $region44
        $region43: #{tpu_custom_call.1} parent=11 // pred_region
          _
        $region44: #{tpu_custom_call.1} parent=11 // pred_fallthru
          _
        // Predicated region
        $region45: #{tpu_custom_call.1} parent=11 // pred_check
          %p443 = pneg %p281
        $region46: #{tpu_custom_call.1} parent=11 // pred_check_branch
          %445 = sbr.rel (%p443) target = $region48
        $region47: #{tpu_custom_call.1} parent=11 // pred_region
          _
        $region48: #{tpu_custom_call.1} parent=11 // pred_fallthru
          _
        // Predicated region
        $region49: #{tpu_custom_call.1} parent=11 // pred_check
          %p446 = pneg %p302
        $region50: #{tpu_custom_call.1} parent=11 // pred_check_branch
          %448 = sbr.rel (%p446) target = $region52
        $region51: #{tpu_custom_call.1} parent=11 // pred_region
          %450 = vsyncadd [#allocation12], 0
          %s451 = sshll.u32 %s11, 4
          %s452 = int_to_ptr.hbm [resolvable:$true] %s451
          %s453 = sshll.u32 [#allocation11], 4
          %s454 = int_to_ptr.vmem [resolvable:$true] %s453
          %459 = dma.hbm_to_vmem [thread:$0]  %s452, 256, %s454, [#allocation12], 64, 64, 4
        $region52: #{tpu_custom_call.1} parent=11 // pred_fallthru
          _
        // Predicated region
        $region53: #{tpu_custom_call.1} parent=11 // pred_check
          %p460 = pneg %p323
        $region54: #{tpu_custom_call.1} parent=11 // pred_check_branch
          %462 = sbr.rel (%p460) target = $region56
        $region55: #{tpu_custom_call.1} parent=11 // pred_region
          _
        $region56: #{tpu_custom_call.1} parent=11 // pred_fallthru
          _
        // Predicated region
        $region57: #{tpu_custom_call.1} parent=11 // pred_check
          %p463 = pneg %p344
        $region58: #{tpu_custom_call.1} parent=11 // pred_check_branch
          %465 = sbr.rel (%p463) target = $region60
        $region59: #{tpu_custom_call.1} parent=11 // pred_region
          _
        $region60: #{tpu_custom_call.1} parent=11 // pred_fallthru
          _
        // Predicated region
        $region61: #{tpu_custom_call.1} parent=11 // pred_check
          %p466 = pneg %p365
        $region62: #{tpu_custom_call.1} parent=11 // pred_check_branch
          %468 = sbr.rel (%p466) target = $region64
        $region63: #{tpu_custom_call.1} parent=11 // pred_region
          _
        $region64: #{tpu_custom_call.1} parent=11 // pred_fallthru
          _
      $region12: #{tpu_custom_call.1} parent=5 // pred_fallthru
        _
      %p469 = scmp.lt.s32.totalorder %s26, 2
      // Predicated region
      $region65: #{tpu_custom_call.1} parent=5 // pred_check
        %p470 = pneg %p469
      $region66: #{tpu_custom_call.1} parent=5 // pred_check_branch
        %472 = sbr.rel (%p470) target = $region68
      $region67: #{tpu_custom_call.1} parent=5 // pred_region
        // Predicated region
        $region69: #{tpu_custom_call.1} parent=67 // pred_check
          %p473 = pneg %p58
        $region70: #{tpu_custom_call.1} parent=67 // pred_check_branch
          %475 = sbr.rel (%p473) target = $region72
        $region71: #{tpu_custom_call.1} parent=67 // pred_region
          %p476 = scmp.lt.s32.totalorder %s33, 1
          %s477 = scalar_select %p476, %s33, 1
          %s478 = smul.addr %s477, 8
          %s479 = scalar_lea.vmem %s0, %s478
        $region72: #{tpu_custom_call.1} parent=67 // pred_fallthru
          _
        // Predicated region
        $region73: #{tpu_custom_call.1} parent=67 // pred_check
          %p480 = pneg %p86
        $region74: #{tpu_custom_call.1} parent=67 // pred_check_branch
          %482 = sbr.rel (%p480) target = $region76
        $region75: #{tpu_custom_call.1} parent=67 // pred_region
          %p483 = scmp.lt.s32.totalorder %s33, 1
          %s484 = scalar_select %p483, %s33, 1
          %p485 = scmp.lt.s32.totalorder %s34, 0
          %s486 = scalar_select %p485, %s34, 0
          %s487 = sadd.s32 %s486, %s484
          %s488 = smul.addr %s487, 8
          %s489 = scalar_lea.vmem %s1, %s488
        $region76: #{tpu_custom_call.1} parent=67 // pred_fallthru
          _
      $region68: #{tpu_custom_call.1} parent=5 // pred_fallthru
        _
      %p490 = scmp.le.s32.totalorder 1, %s26
      %p491 = scmp.lt.s32.totalorder %s26, 3
      %p492 = pnand %p490, %p491
      %p493 = pneg %p492
      // Predicated region
      $region77: #{tpu_custom_call.1} parent=5 // pred_check
        _
      $region78: #{tpu_custom_call.1} parent=5 // pred_check_branch
        %495 = sbr.rel (%p492) target = $region80
      $region79: #{tpu_custom_call.1} parent=5 // pred_region
        %s496 = ssub.s32 %s26, 1
        // Predicated region
        $region81: #{tpu_custom_call.1} parent=79 // pred_check
          %p497 = pneg %p218
        $region82: #{tpu_custom_call.1} parent=79 // pred_check_branch
          %499 = sbr.rel (%p497) target = $region84
        $region83: #{tpu_custom_call.1} parent=79 // pred_region
          %501 = dma.done [#allocation9], 256
        $region84: #{tpu_custom_call.1} parent=79 // pred_fallthru
          _
        // Predicated region
        $region85: #{tpu_custom_call.1} parent=79 // pred_check
          %p502 = pneg %p302
        $region86: #{tpu_custom_call.1} parent=79 // pred_check_branch
          %504 = sbr.rel (%p502) target = $region88
        $region87: #{tpu_custom_call.1} parent=79 // pred_region
          %506 = dma.done [#allocation12], 256
        $region88: #{tpu_custom_call.1} parent=79 // pred_fallthru
          _
        %p507 = scmp.lt.s32.totalorder %s35, 1
        %s508 = scalar_select %p507, %s35, 1
        %s509 = smul.addr %s508, 8
        %s510 = scalar_lea.vmem %s0, %s509
        %p511 = pneg %p64
        %p512 = pneg %p61
        %p513 = scmp.lt.s32.totalorder %s35, 1
        %s514 = scalar_select %p513, %s35, 1
        %p515 = scmp.lt.s32.totalorder %s36, 0
        %s516 = scalar_select %p515, %s36, 0
        %s517 = sadd.s32 %s516, %s514
        %s518 = smul.addr %s517, 8
        %s519 = scalar_lea.vmem %s1, %s518
        %p520 = pneg %p92
        %p521 = pneg %p89
        %p522 = pneg %p113
        %p523 = pneg %p110
        %p524 = pneg %p134
        %p525 = pneg %p131
        %p526 = pneg %p155
        %p527 = pneg %p152
        %p528 = pneg %p176
        %p529 = pneg %p173
        %p530 = pneg %p197
        %p531 = pneg %p194
        %p532 = pneg %p218
        %p533 = pneg %p215
        %p534 = pneg %p239
        %p535 = pneg %p236
        %p536 = pneg %p260
        %p537 = pneg %p257
        %p538 = pneg %p281
        %p539 = pneg %p278
        %p540 = pneg %p302
        %p541 = pneg %p299
        %p542 = pneg %p323
        %p543 = pneg %p320
        %p544 = pneg %p344
        %p545 = pneg %p341
        %p546 = pneg %p365
        %p547 = pneg %p362
        %p548 = pneg %p393
        %p549 = pneg %p390
        %s550 = sand.u32 %s380, 1
        %s551 = scalar_lea.sflag [#allocation10], %s550
        %s552 = sand.u32 %s380, 1
        %s553 = smul.addr %s552, 8
        %s554 = scalar_lea.vmem [#allocation13], %s553
        %p555 = scmp.lt.s32.totalorder %s35, 1
        %s556 = scalar_select %p555, %s35, 1
        %s557 = smul.addr %s556, 8
        %s558 = scalar_lea.vmem %s0, %s557
        %p559 = scmp.lt.s32.totalorder %s35, 1
        %s560 = scalar_select %p559, %s35, 1
        %p561 = scmp.lt.s32.totalorder %s36, 0
        %s562 = scalar_select %p561, %s36, 0
        %s563 = sadd.s32 %s562, %s560
        %s564 = smul.addr %s563, 8
        %s565 = scalar_lea.vmem %s1, %s564
        %s567 = smul.u32 %s36, 8
        %v568 = vld [vmem:[%s2] sm:$0x1]
        %v569 = vld [vmem:[%s3] sm:$0x1]
        %v570 = vld [vmem:[%s558] sm:$0xff]
        %vm571 = vcmask 261120
        %v572 = vsel %vm571, %v570, 0.0
        %573 = vadd.xlane.f32.xlu0 %v572
        %v574 = vpop.xlane.xlu0 %573
        %v575 = vrcp.pop 32.0
        %v576 = vmul.f32 32.0, %v575
        %v577 = vsub.f32 1.0, %v576
        %v578 = vmul.f32 %v575, %v577
        %v579 = vadd.f32 %v575, %v578
        %vm580 = vweird.f32 %v575
        %v581 = vsel %vm580, %v575, %v579
        %v582 = vmul.f32 %v574, %v581
        %v583 = vsub.f32 %v570, %v582
        %v584 = vmul.f32 %v583, %v583
        %v585 = vsel %vm571, %v584, 0.0
        %586 = vadd.xlane.f32.xlu0 %v585
        %v587 = vpop.xlane.xlu0 %586
        %v588 = vmul.f32 %v587, %v581
        %v589 = vadd.f32 %v588, 1e-05
        %v590 = vrsqrt.pop %v589
        %v591 = vmul.f32 %v590, %v589
        %v592 = vmul.f32 %v591, %v590
        %v593 = vmul.f32 0.5, %v592
        %v594 = vsub.f32 1.5, %v593
        %v595 = vmul.f32 %v590, %v594
        %vm596 = vweird.f32 %v589
        %vm597 = vweird.f32 %v590
        %vm598 = vmor %vm596, %vm597
        %v599 = vsel %vm598, %v590, %v595
        %v600 = vmul.f32 %v583, %v599
        %v602 = vperm.slane %v568, 0
        %v604 = vmul.f32 %v600, %v602
        %v606 = vperm.slane %v569, 0
        %v608 = vadd.f32 %v604, %v606
        %v609 = vpack.c.bf16 %v608, %v608
        %v610 = vld [vmem:[%s5] sm:$0xf]
        %v611 = vld [vmem:[%s5 + $0x4] sm:$0xf]
        %v612 = vld [vmem:[%s5 + $0x8] sm:$0xf]
        %v613 = vld [vmem:[%s5 + $0xc] sm:$0xf]
        %v618 = vunpack.c.l.b16 %v610
        %v619 = vunpack.c.l.b16 %v611
        %v620 = vunpack.c.l.b16 %v612
        %v621 = vunpack.c.l.b16 %v613
        %v622 = vpack.c.b16 %v619, %v618
        %v623 = vpack.c.b16 %v621, %v620
        %v627 = vsel %vm571, %v609, 0
        %629 = vmatpush.bf16.msra.mxu0 0
        %630 = vmatpush.bf16.msra.mxu0 0
        %631 = vmatpush.bf16.msra.mxu0 0
        %632 = vmatpush.bf16.msra.mxu0 0
        %633 = vmatpush.bf16.msra.mxu0 0
        %634 = vmatpush.bf16.msra.mxu0 0
        %635 = vmatpush.bf16.msra.mxu0 %v623
        %636 = vmatpush.bf16.msra.mxu0 %v622
        %637 = vmatmul.bf16.gmra.mxu0 %v627
        %v638 = vpop.f32.mrf.mxu0
        %v639 = vadd.f32 0.0, %v638
        %v640 = vpop.f32.mrf.mxu0
        %641 = vdwg.mxu0
        %v642 = vld [vmem:[%s6] sm:$0xf]
        %v643 = vld [vmem:[%s6 + $0x4] sm:$0xf]
        %v644 = vld [vmem:[%s6 + $0x8] sm:$0xf]
        %v645 = vld [vmem:[%s6 + $0xc] sm:$0xf]
        %v650 = vunpack.c.l.b16 %v642
        %v651 = vunpack.c.l.b16 %v643
        %v652 = vunpack.c.l.b16 %v644
        %v653 = vunpack.c.l.b16 %v645
        %v654 = vpack.c.b16 %v651, %v650
        %v655 = vpack.c.b16 %v653, %v652
        %658 = vmatpush.bf16.msra.mxu0 0
        %659 = vmatpush.bf16.msra.mxu0 0
        %660 = vmatpush.bf16.msra.mxu0 0
        %661 = vmatpush.bf16.msra.mxu0 0
        %662 = vmatpush.bf16.msra.mxu0 0
        %663 = vmatpush.bf16.msra.mxu0 0
        %664 = vmatpush.bf16.msra.mxu0 %v655
        %665 = vmatpush.bf16.msra.mxu0 %v654
        %666 = vmatmul.bf16.gmra.mxu0 %v627
        %v667 = vpop.f32.mrf.mxu0
        %v668 = vadd.f32 0.0, %v667
        %v669 = vpop.f32.mrf.mxu0
        %670 = vdwg.mxu0
        %v671 = vpack.c.bf16 %v639, %v639
        %vm672 = vcmask 60416
        %673 = vst.msk [vmem:[#allocation2] sm:$0xf] %vm672, %v671
        %v674 = vpack.c.bf16 %v668, %v668
        %675 = vst.msk [vmem:[#allocation3] sm:$0xf] %vm672, %v674
        %677 = vrot.lane.b32.xlu0 %v671, 120
        %v678 = vpop.permute.xlu0 %677
        %s680 = scalar_lea.vmem [#allocation2], 4
        %681 = vst.msk [vmem:[%s680] sm:$0xf] %vm672, %v678
        %683 = vrot.lane.b32.xlu0 %v674, 120
        %v684 = vpop.permute.xlu0 %683
        %s686 = scalar_lea.vmem [#allocation3], 4
        %687 = vst.msk [vmem:[%s686] sm:$0xf] %vm672, %v684
        %688 = vrot.lane.b32.xlu0 %v671, 112
        %v689 = vpop.permute.xlu0 %688
        %s691 = scalar_lea.vmem [#allocation2], 8
        %692 = vst.msk [vmem:[%s691] sm:$0xf] %vm672, %v689
        %693 = vrot.lane.b32.xlu0 %v674, 112
        %v694 = vpop.permute.xlu0 %693
        %s696 = scalar_lea.vmem [#allocation3], 8
        %697 = vst.msk [vmem:[%s696] sm:$0xf] %vm672, %v694
        %698 = vrot.lane.b32.xlu0 %v671, 104
        %v699 = vpop.permute.xlu0 %698
        %s701 = scalar_lea.vmem [#allocation2], 12
        %702 = vst.msk [vmem:[%s701] sm:$0xf] %vm672, %v699
        %703 = vrot.lane.b32.xlu0 %v674, 104
        %v704 = vpop.permute.xlu0 %703
        %s706 = scalar_lea.vmem [#allocation3], 12
        %707 = vst.msk [vmem:[%s706] sm:$0xf] %vm672, %v704
        %v708 = vld [vmem:[%s565] sm:$0xff]
        %v709 = vsel %vm571, %v708, 0.0
        %710 = vadd.xlane.f32.xlu0 %v709
        %v711 = vpop.xlane.xlu0 %710
        %v712 = vmul.f32 %v711, %v581
        %v713 = vsub.f32 %v708, %v712
        %v714 = vmul.f32 %v713, %v713
        %v715 = vsel %vm571, %v714, 0.0
        %716 = vadd.xlane.f32.xlu0 %v715
        %v717 = vpop.xlane.xlu0 %716
        %v718 = vmul.f32 %v717, %v581
        %v719 = vadd.f32 %v718, 1e-05
        %v720 = vrsqrt.pop %v719
        %v721 = vmul.f32 %v720, %v719
        %v722 = vmul.f32 %v721, %v720
        %v723 = vmul.f32 0.5, %v722
        %v724 = vsub.f32 1.5, %v723
        %v725 = vmul.f32 %v720, %v724
        %vm726 = vweird.f32 %v719
        %vm727 = vweird.f32 %v720
        %vm728 = vmor %vm726, %vm727
        %v729 = vsel %vm728, %v720, %v725
        %v730 = vmul.f32 %v713, %v729
        %v731 = vmul.f32 %v730, %v602
        %v732 = vadd.f32 %v731, %v606
        %v733 = vpack.c.bf16 %v732, %v732
        %v734 = vld [vmem:[%s4] sm:$0xf]
        %v735 = vld [vmem:[%s4 + $0x4] sm:$0xf]
        %v736 = vld [vmem:[%s4 + $0x8] sm:$0xf]
        %v737 = vld [vmem:[%s4 + $0xc] sm:$0xf]
        %v742 = vunpack.c.l.b16 %v734
        %v743 = vunpack.c.l.b16 %v735
        %v744 = vunpack.c.l.b16 %v736
        %v745 = vunpack.c.l.b16 %v737
        %v746 = vpack.c.b16 %v743, %v742
        %v747 = vpack.c.b16 %v745, %v744
        %v751 = vsel %vm571, %v733, 0
        %753 = vmatpush.bf16.msra.mxu0 0
        %754 = vmatpush.bf16.msra.mxu0 0
        %755 = vmatpush.bf16.msra.mxu0 0
        %756 = vmatpush.bf16.msra.mxu0 0
        %757 = vmatpush.bf16.msra.mxu0 0
        %758 = vmatpush.bf16.msra.mxu0 0
        %759 = vmatpush.bf16.msra.mxu0 %v747
        %760 = vmatpush.bf16.msra.mxu0 %v746
        %761 = vmatmul.bf16.gmra.mxu0 %v751
        %v762 = vpop.f32.mrf.mxu0
        %v763 = vadd.f32 0.0, %v762
        %v764 = vpop.f32.mrf.mxu0
        %765 = vdwg.mxu0
        %v766 = vmul.f32 %v763, 0.35355338
        %v767 = vpack.c.bf16 %v766, %v766
        %768 = vst.msk [vmem:[#allocation4] sm:$0xf] %vm672, %v767
        %770 = vrot.lane.b32.xlu0 %v767, 120
        %v771 = vpop.permute.xlu0 %770
        %s773 = scalar_lea.vmem [#allocation4], 4
        %774 = vst.msk [vmem:[%s773] sm:$0xf] %vm672, %v771
        %775 = vrot.lane.b32.xlu0 %v767, 112
        %v776 = vpop.permute.xlu0 %775
        %s778 = scalar_lea.vmem [#allocation4], 8
        %779 = vst.msk [vmem:[%s778] sm:$0xf] %vm672, %v776
        %780 = vrot.lane.b32.xlu0 %v767, 104
        %v781 = vpop.permute.xlu0 %780
        %s783 = scalar_lea.vmem [#allocation4], 12
        %784 = vst.msk [vmem:[%s783] sm:$0xf] %vm672, %v781
        %vm785 = vcmask 7168
        %786 = vst.msk [vmem:[#allocation5] sm:$0xff] %vm785, -inf
        %787 = vst.msk [vmem:[#allocation5 + $0x8] sm:$0xff] %vm785, -inf
        %788 = vst.msk [vmem:[#allocation5 + $0x10] sm:$0xff] %vm785, -inf
        %789 = vst.msk [vmem:[#allocation5 + $0x18] sm:$0xff] %vm785, -inf
        %790 = vst.msk [vmem:[#allocation6] sm:$0xff] %vm785, 0.0
        %791 = vst.msk [vmem:[#allocation6 + $0x8] sm:$0xff] %vm785, 0.0
        %792 = vst.msk [vmem:[#allocation6 + $0x10] sm:$0xff] %vm785, 0.0
        %793 = vst.msk [vmem:[#allocation6 + $0x18] sm:$0xff] %vm785, 0.0
        %vm794 = vcmask 64512
        %795 = vst.msk [vmem:[#allocation7] sm:$0xff] %vm794, 0.0
        %796 = vst.msk [vmem:[#allocation7 + $0x8] sm:$0xff] %vm794, 0.0
        %797 = vst.msk [vmem:[#allocation7 + $0x10] sm:$0xff] %vm794, 0.0
        %798 = vst.msk [vmem:[#allocation7 + $0x18] sm:$0xff] %vm794, 0.0
        %s799 = sadd.s32 %s36, 1
        // While loop
        $region89: #{tpu_custom_call.1} parent=79 // loop_pre_header
          _
        $region90: #{tpu_custom_call.1} parent=79 // loop_header
          %s801 = sphi 0, %s803
          %p802 = scmp.ge.s32.totalorder %s801, %s799
        $region91: #{tpu_custom_call.1} parent=79 // loop_header_branch
          %805 = sbr.rel (%p802) target = $region95
        $region92: #{tpu_custom_call.1} parent=79 // loop_body
          %s806 = smul.u32 %s801, 8
          %v807 = vld [vmem:[#allocation4] sm:$0xf]
          %v808 = vld [vmem:[#allocation4 + $0x4] sm:$0xf]
          %v809 = vld [vmem:[#allocation4 + $0x8] sm:$0xf]
          %v810 = vld [vmem:[#allocation4 + $0xc] sm:$0xf]
          %s811 = sshra.s32 %s806, 3
          %s812 = sand.u32 %s806, 7
          %s813 = smul.addr %s811, 4
          %s814 = scalar_lea.vmem [#allocation2], %s813
          %v815 = vld [vmem:[%s814] sm:$0xf]
          %v816 = vld [vmem:[%s814 + $0x4] sm:$0xf]
          %v817 = vld [vmem:[%s814 + $0x8] sm:$0xf]
          %v818 = vld [vmem:[%s814 + $0xc] sm:$0xf]
          %s819 = smul.addr %s811, 4
          %s820 = scalar_lea.vmem [#allocation3], %s819
          %v821 = vld [vmem:[%s820] sm:$0xf]
          %v822 = vld [vmem:[%s820 + $0x4] sm:$0xf]
          %v823 = vld [vmem:[%s820 + $0x8] sm:$0xf]
          %v824 = vld [vmem:[%s820 + $0xc] sm:$0xf]
          %v826 = vsel %vm794, %v807, 0
          %v829 = vsel %vm794, %v815, 0
          %831 = vmatpush.bf16.xpose.msra.mxu0 0
          %832 = vmatpush.bf16.xpose.msra.mxu0 0
          %833 = vmatpush.bf16.xpose.msra.mxu0 0
          %834 = vmatpush.bf16.xpose.msra.mxu0 0
          %835 = vmatpush.bf16.xpose.msra.mxu0 0
          %836 = vmatpush.bf16.xpose.msra.mxu0 0
          %837 = vmatpush.bf16.xpose.msra.mxu0 0
          %838 = vmatpush.bf16.xpose.msra.mxu0 %v829
          %839 = vmatmul.bf16.gmra.mxu0 %v826
          %v840 = vpop.f32.mrf.mxu0
          %v841 = vadd.f32 0.0, %v840
          %v842 = vpop.f32.mrf.mxu0
          %843 = vdwg.mxu0
          %v845 = vsel %vm794, %v808, 0
          %v848 = vsel %vm794, %v816, 0
          %850 = vmatpush.bf16.xpose.msra.mxu0 0
          %851 = vmatpush.bf16.xpose.msra.mxu0 0
          %852 = vmatpush.bf16.xpose.msra.mxu0 0
          %853 = vmatpush.bf16.xpose.msra.mxu0 0
          %854 = vmatpush.bf16.xpose.msra.mxu0 0
          %855 = vmatpush.bf16.xpose.msra.mxu0 0
          %856 = vmatpush.bf16.xpose.msra.mxu0 0
          %857 = vmatpush.bf16.xpose.msra.mxu0 %v848
          %858 = vmatmul.bf16.gmra.mxu0 %v845
          %v859 = vpop.f32.mrf.mxu0
          %v860 = vadd.f32 0.0, %v859
          %v861 = vpop.f32.mrf.mxu0
          %862 = vdwg.mxu0
          %v864 = vsel %vm794, %v809, 0
          %v867 = vsel %vm794, %v817, 0
          %869 = vmatpush.bf16.xpose.msra.mxu0 0
          %870 = vmatpush.bf16.xpose.msra.mxu0 0
          %871 = vmatpush.bf16.xpose.msra.mxu0 0
          %872 = vmatpush.bf16.xpose.msra.mxu0 0
          %873 = vmatpush.bf16.xpose.msra.mxu0 0
          %874 = vmatpush.bf16.xpose.msra.mxu0 0
          %875 = vmatpush.bf16.xpose.msra.mxu0 0
          %876 = vmatpush.bf16.xpose.msra.mxu0 %v867
          %877 = vmatmul.bf16.gmra.mxu0 %v864
          %v878 = vpop.f32.mrf.mxu0
          %v879 = vadd.f32 0.0, %v878
          %v880 = vpop.f32.mrf.mxu0
          %881 = vdwg.mxu0
          %v883 = vsel %vm794, %v810, 0
          %v886 = vsel %vm794, %v818, 0
          %888 = vmatpush.bf16.xpose.msra.mxu0 0
          %889 = vmatpush.bf16.xpose.msra.mxu0 0
          %890 = vmatpush.bf16.xpose.msra.mxu0 0
          %891 = vmatpush.bf16.xpose.msra.mxu0 0
          %892 = vmatpush.bf16.xpose.msra.mxu0 0
          %893 = vmatpush.bf16.xpose.msra.mxu0 0
          %894 = vmatpush.bf16.xpose.msra.mxu0 0
          %895 = vmatpush.bf16.xpose.msra.mxu0 %v886
          %896 = vmatmul.bf16.gmra.mxu0 %v883
          %v897 = vpop.f32.mrf.mxu0
          %v898 = vadd.f32 0.0, %v897
          %v899 = vpop.f32.mrf.mxu0
          %900 = vdwg.mxu0
          %v901 = vlaneseq
          %v902 = vshrl.u32 %v901, 7
          %v903 = vstv %s567
          %v904 = vadd.s32 %v903, %v902
          %v905 = vlaneseq
          %v906 = vand.u32 %v905, 127
          %v907 = vstv %s806
          %v908 = vadd.s32 %v907, %v906
          %vm909 = vcmp.ge.s32.totalorder %v904, %v908
          %v910 = vsel %vm909, 1, 0
          %vm911 = vcmp.eq.s32.totalorder %v910, 1
          %v912 = vsel %vm911, %v841, -inf
          %v913 = vsel %vm911, %v860, -inf
          %v914 = vsel %vm911, %v879, -inf
          %v915 = vsel %vm911, %v898, -inf
          %v916 = vld [vmem:[#allocation5] sm:$0xff]
          %v917 = vld [vmem:[#allocation5 + $0x8] sm:$0xff]
          %v918 = vld [vmem:[#allocation5 + $0x10] sm:$0xff]
          %v919 = vld [vmem:[#allocation5 + $0x18] sm:$0xff]
          %v920 = vsel %vm794, %v912, -inf
          %921 = vmax.xlane.f32.xlu0 %v920
          %v922 = vpop.xlane.xlu0 %921
          %v923 = vsel %vm794, %v913, -inf
          %924 = vmax.xlane.f32.xlu0 %v923
          %v925 = vpop.xlane.xlu0 %924
          %v926 = vsel %vm794, %v914, -inf
          %927 = vmax.xlane.f32.xlu0 %v926
          %v928 = vpop.xlane.xlu0 %927
          %v929 = vsel %vm794, %v915, -inf
          %930 = vmax.xlane.f32.xlu0 %v929
          %v931 = vpop.xlane.xlu0 %930
          %v932 = vmax.f32 %v916, %v922
          %v933 = vmax.f32 %v917, %v925
          %v934 = vmax.f32 %v918, %v928
          %v935 = vmax.f32 %v919, %v931
          %v936 = vsub.f32 %v916, %v932
          %v937 = vsub.f32 %v917, %v933
          %v938 = vsub.f32 %v918, %v934
          %v939 = vsub.f32 %v919, %v935
          %v940 = vmul.f32 %v936, 1.442695
          %v941 = vpow.pop %v940
          %v942 = vmul.f32 %v937, 1.442695
          %v943 = vpow.pop %v942
          %v944 = vmul.f32 %v938, 1.442695
          %v945 = vpow.pop %v944
          %v946 = vmul.f32 %v939, 1.442695
          %v947 = vpow.pop %v946
          %949 = vset.pattern.permute.xlu0 0
          %950 = vperm.xlu0 %949, %v932
          %v951 = vpop.permute.xlu0 %950
          %954 = vset.pattern.permute.xlu0 0
          %955 = vperm.xlu0 %954, %v933
          %v956 = vpop.permute.xlu0 %955
          %959 = vset.pattern.permute.xlu0 0
          %960 = vperm.xlu0 %959, %v934
          %v961 = vpop.permute.xlu0 %960
          %964 = vset.pattern.permute.xlu0 0
          %965 = vperm.xlu0 %964, %v935
          %v966 = vpop.permute.xlu0 %965
          %v968 = vsub.f32 %v912, %v951
          %v969 = vsub.f32 %v913, %v956
          %v970 = vsub.f32 %v914, %v961
          %v971 = vsub.f32 %v915, %v966
          %v972 = vmul.f32 %v968, 1.442695
          %v973 = vpow.pop %v972
          %v974 = vmul.f32 %v969, 1.442695
          %v975 = vpow.pop %v974
          %v976 = vmul.f32 %v970, 1.442695
          %v977 = vpow.pop %v976
          %v978 = vmul.f32 %v971, 1.442695
          %v979 = vpow.pop %v978
          %v980 = vld [vmem:[#allocation6] sm:$0xff]
          %v981 = vld [vmem:[#allocation6 + $0x8] sm:$0xff]
          %v982 = vld [vmem:[#allocation6 + $0x10] sm:$0xff]
          %v983 = vld [vmem:[#allocation6 + $0x18] sm:$0xff]
          %v984 = vmul.f32 %v941, %v980
          %v985 = vmul.f32 %v943, %v981
          %v986 = vmul.f32 %v945, %v982
          %v987 = vmul.f32 %v947, %v983
          %v988 = vsel %vm794, %v973, 0.0
          %989 = vadd.xlane.f32.xlu0 %v988
          %v990 = vpop.xlane.xlu0 %989
          %v991 = vsel %vm794, %v975, 0.0
          %992 = vadd.xlane.f32.xlu0 %v991
          %v993 = vpop.xlane.xlu0 %992
          %v994 = vsel %vm794, %v977, 0.0
          %995 = vadd.xlane.f32.xlu0 %v994
          %v996 = vpop.xlane.xlu0 %995
          %v997 = vsel %vm794, %v979, 0.0
          %998 = vadd.xlane.f32.xlu0 %v997
          %v999 = vpop.xlane.xlu0 %998
          %v1000 = vadd.f32 %v984, %v990
          %v1001 = vadd.f32 %v985, %v993
          %v1002 = vadd.f32 %v986, %v996
          %v1003 = vadd.f32 %v987, %v999
          %1004 = vst.msk [vmem:[#allocation6] sm:$0xff] %vm785, %v1000
          %1005 = vst.msk [vmem:[#allocation6 + $0x8] sm:$0xff] %vm785, %v1001
          %1006 = vst.msk [vmem:[#allocation6 + $0x10] sm:$0xff] %vm785, %v1002
          %1007 = vst.msk [vmem:[#allocation6 + $0x18] sm:$0xff] %vm785, %v1003
          %v1008 = vpack.c.bf16 %v973, %v973
          %v1009 = vpack.c.bf16 %v975, %v975
          %v1010 = vpack.c.bf16 %v977, %v977
          %v1011 = vpack.c.bf16 %v979, %v979
          %v1013 = vsel %vm794, %v1008, 0
          %vm1015 = vcmask 1043456
          %v1017 = vsel %vm1015, %v821, 0
          %1019 = vmatpush.bf16.msra.mxu0 0
          %1020 = vmatpush.bf16.msra.mxu0 0
          %1021 = vmatpush.bf16.msra.mxu0 0
          %1022 = vmatpush.bf16.msra.mxu0 0
          %1023 = vmatpush.bf16.msra.mxu0 0
          %1024 = vmatpush.bf16.msra.mxu0 0
          %1025 = vmatpush.bf16.msra.mxu0 0
          %1026 = vmatpush.bf16.msra.mxu0 %v1017
          %1027 = vmatmul.bf16.gmra.mxu0 %v1013
          %v1028 = vpop.f32.mrf.mxu0
          %v1029 = vadd.f32 0.0, %v1028
          %v1030 = vpop.f32.mrf.mxu0
          %1031 = vdwg.mxu0
          %v1033 = vsel %vm794, %v1009, 0
          %v1036 = vsel %vm1015, %v822, 0
          %1038 = vmatpush.bf16.msra.mxu0 0
          %1039 = vmatpush.bf16.msra.mxu0 0
          %1040 = vmatpush.bf16.msra.mxu0 0
          %1041 = vmatpush.bf16.msra.mxu0 0
          %1042 = vmatpush.bf16.msra.mxu0 0
          %1043 = vmatpush.bf16.msra.mxu0 0
          %1044 = vmatpush.bf16.msra.mxu0 0
          %1045 = vmatpush.bf16.msra.mxu0 %v1036
          %1046 = vmatmul.bf16.gmra.mxu0 %v1033
          %v1047 = vpop.f32.mrf.mxu0
          %v1048 = vadd.f32 0.0, %v1047
          %v1049 = vpop.f32.mrf.mxu0
          %1050 = vdwg.mxu0
          %v1052 = vsel %vm794, %v1010, 0
          %v1055 = vsel %vm1015, %v823, 0
          %1057 = vmatpush.bf16.msra.mxu0 0
          %1058 = vmatpush.bf16.msra.mxu0 0
          %1059 = vmatpush.bf16.msra.mxu0 0
          %1060 = vmatpush.bf16.msra.mxu0 0
          %1061 = vmatpush.bf16.msra.mxu0 0
          %1062 = vmatpush.bf16.msra.mxu0 0
          %1063 = vmatpush.bf16.msra.mxu0 0
          %1064 = vmatpush.bf16.msra.mxu0 %v1055
          %1065 = vmatmul.bf16.gmra.mxu0 %v1052
          %v1066 = vpop.f32.mrf.mxu0
          %v1067 = vadd.f32 0.0, %v1066
          %v1068 = vpop.f32.mrf.mxu0
          %1069 = vdwg.mxu0
          %v1071 = vsel %vm794, %v1011, 0
          %v1074 = vsel %vm1015, %v824, 0
          %1076 = vmatpush.bf16.msra.mxu0 0
          %1077 = vmatpush.bf16.msra.mxu0 0
          %1078 = vmatpush.bf16.msra.mxu0 0
          %1079 = vmatpush.bf16.msra.mxu0 0
          %1080 = vmatpush.bf16.msra.mxu0 0
          %1081 = vmatpush.bf16.msra.mxu0 0
          %1082 = vmatpush.bf16.msra.mxu0 0
          %1083 = vmatpush.bf16.msra.mxu0 %v1074
          %1084 = vmatmul.bf16.gmra.mxu0 %v1071
          %v1085 = vpop.f32.mrf.mxu0
          %v1086 = vadd.f32 0.0, %v1085
          %v1087 = vpop.f32.mrf.mxu0
          %1088 = vdwg.mxu0
          %v1089 = vld [vmem:[#allocation7] sm:$0xff]
          %v1090 = vld [vmem:[#allocation7 + $0x8] sm:$0xff]
          %v1091 = vld [vmem:[#allocation7 + $0x10] sm:$0xff]
          %v1092 = vld [vmem:[#allocation7 + $0x18] sm:$0xff]
          %1094 = vset.pattern.permute.xlu0 0
          %1095 = vperm.xlu0 %1094, %v941
          %v1096 = vpop.permute.xlu0 %1095
          %1099 = vset.pattern.permute.xlu0 0
          %1100 = vperm.xlu0 %1099, %v943
          %v1101 = vpop.permute.xlu0 %1100
          %1104 = vset.pattern.permute.xlu0 0
          %1105 = vperm.xlu0 %1104, %v945
          %v1106 = vpop.permute.xlu0 %1105
          %1109 = vset.pattern.permute.xlu0 0
          %1110 = vperm.xlu0 %1109, %v947
          %v1111 = vpop.permute.xlu0 %1110
          %v1113 = vmul.f32 %v1096, %v1089
          %v1114 = vmul.f32 %v1101, %v1090
          %v1115 = vmul.f32 %v1106, %v1091
          %v1116 = vmul.f32 %v1111, %v1092
          %v1117 = vadd.f32 %v1113, %v1029
          %v1118 = vadd.f32 %v1114, %v1048
          %v1119 = vadd.f32 %v1115, %v1067
          %v1120 = vadd.f32 %v1116, %v1086
          %1121 = vst.msk [vmem:[#allocation7] sm:$0xff] %vm794, %v1117
          %1122 = vst.msk [vmem:[#allocation7 + $0x8] sm:$0xff] %vm794, %v1118
          %1123 = vst.msk [vmem:[#allocation7 + $0x10] sm:$0xff] %vm794, %v1119
          %1124 = vst.msk [vmem:[#allocation7 + $0x18] sm:$0xff] %vm794, %v1120
          %1125 = vst.msk [vmem:[#allocation5] sm:$0xff] %vm785, %v932
          %1126 = vst.msk [vmem:[#allocation5 + $0x8] sm:$0xff] %vm785, %v933
          %1127 = vst.msk [vmem:[#allocation5 + $0x10] sm:$0xff] %vm785, %v934
          %1128 = vst.msk [vmem:[#allocation5 + $0x18] sm:$0xff] %vm785, %v935
        $region93: #{tpu_custom_call.1} parent=79 // loop_footer
          %s803 = sadd.s32 %s801, 1
        $region94: #{tpu_custom_call.1} parent=79 // loop_footer_branch
          %800 = sbr.rel target = $region90
        $region95: #{tpu_custom_call.1} parent=79 // loop_exit
          _
        %v1129 = vld [vmem:[#allocation6] sm:$0xff]
        %v1130 = vld [vmem:[#allocation6 + $0x8] sm:$0xff]
        %v1131 = vld [vmem:[#allocation6 + $0x10] sm:$0xff]
        %v1132 = vld [vmem:[#allocation6 + $0x18] sm:$0xff]
        %v1133 = vrcp.pop %v1129
        %v1134 = vrcp.pop %v1130
        %v1135 = vrcp.pop %v1131
        %v1136 = vrcp.pop %v1132
        %v1137 = vld [vmem:[#allocation7] sm:$0xff]
        %v1138 = vld [vmem:[#allocation7 + $0x8] sm:$0xff]
        %v1139 = vld [vmem:[#allocation7 + $0x10] sm:$0xff]
        %v1140 = vld [vmem:[#allocation7 + $0x18] sm:$0xff]
        %1142 = vset.pattern.permute.xlu0 0
        %1143 = vperm.xlu0 %1142, %v1133
        %v1144 = vpop.permute.xlu0 %1143
        %v1146 = vmul.f32 %v1137, %v1144
        %1148 = vset.pattern.permute.xlu0 0
        %1149 = vperm.xlu0 %1148, %v1134
        %v1150 = vpop.permute.xlu0 %1149
        %v1152 = vmul.f32 %v1138, %v1150
        %1154 = vset.pattern.permute.xlu0 0
        %1155 = vperm.xlu0 %1154, %v1135
        %v1156 = vpop.permute.xlu0 %1155
        %v1158 = vmul.f32 %v1139, %v1156
        %1160 = vset.pattern.permute.xlu0 0
        %1161 = vperm.xlu0 %1160, %v1136
        %v1162 = vpop.permute.xlu0 %1161
        %v1164 = vmul.f32 %v1140, %v1162
        %1166 = vrot.lane.b32.xlu0 %v1152, 8
        %v1167 = vpop.permute.xlu0 %1166
        %1170 = vrot.lane.b32.xlu0 %v1158, 16
        %v1171 = vpop.permute.xlu0 %1170
        %1174 = vrot.lane.b32.xlu0 %v1164, 24
        %v1175 = vpop.permute.xlu0 %1174
        %v1177 = vsel %vm794, %v1146, %v1167
        %vm1178 = vcmask 130048
        %v1179 = vsel %vm1178, %v1177, %v1171
        %vm1180 = vcmask 195584
        %v1181 = vsel %vm1180, %v1179, %v1175
        %v1182 = vpack.c.bf16 %v1181, %v1181
        %v1183 = vld [vmem:[#allocation8] sm:$0xf]
        %v1184 = vld [vmem:[#allocation8 + $0x4] sm:$0xf]
        %v1185 = vld [vmem:[#allocation8 + $0x8] sm:$0xf]
        %v1186 = vld [vmem:[#allocation8 + $0xc] sm:$0xf]
        %v1187 = vld [vmem:[%s8] sm:$0x1]
        %v1189 = vperm.slane %v1187, 0
        %v1195 = vunpack.c.l.b16 %v1183
        %v1196 = vunpack.c.l.b16 %v1184
        %v1197 = vunpack.c.l.b16 %v1185
        %v1198 = vunpack.c.l.b16 %v1186
        %v1199 = vpack.c.b16 %v1196, %v1195
        %v1200 = vpack.c.b16 %v1198, %v1197
        %v1204 = vsel %vm571, %v1182, 0
        %1206 = vmatpush.bf16.msra.mxu0 0
        %1207 = vmatpush.bf16.msra.mxu0 0
        %1208 = vmatpush.bf16.msra.mxu0 0
        %1209 = vmatpush.bf16.msra.mxu0 0
        %1210 = vmatpush.bf16.msra.mxu0 0
        %1211 = vmatpush.bf16.msra.mxu0 0
        %1212 = vmatpush.bf16.msra.mxu0 %v1200
        %1213 = vmatpush.bf16.msra.mxu0 %v1199
        %1214 = vmatmul.bf16.gmra.mxu0 %v1204
        %v1215 = vpop.f32.mrf.mxu0
        %v1216 = vadd.f32 %v1189, %v1215
        %v1217 = vpop.f32.mrf.mxu0
        %1218 = vdwg.mxu0
        %v1219 = vadd.f32 %v708, %v1216
        %v1220 = vld [vmem:[%s9] sm:$0x1]
        %v1221 = vld [vmem:[%s10] sm:$0x1]
        %v1222 = vsel %vm571, %v1219, 0.0
        %1223 = vadd.xlane.f32.xlu0 %v1222
        %v1224 = vpop.xlane.xlu0 %1223
        %v1225 = vmul.f32 %v1224, %v581
        %v1226 = vsub.f32 %v1219, %v1225
        %v1227 = vmul.f32 %v1226, %v1226
        %v1228 = vsel %vm571, %v1227, 0.0
        %1229 = vadd.xlane.f32.xlu0 %v1228
        %v1230 = vpop.xlane.xlu0 %1229
        %v1231 = vmul.f32 %v1230, %v581
        %v1232 = vadd.f32 %v1231, 1e-05
        %v1233 = vrsqrt.pop %v1232
        %v1234 = vmul.f32 %v1233, %v1232
        %v1235 = vmul.f32 %v1234, %v1233
        %v1236 = vmul.f32 0.5, %v1235
        %v1237 = vsub.f32 1.5, %v1236
        %v1238 = vmul.f32 %v1233, %v1237
        %vm1239 = vweird.f32 %v1232
        %vm1240 = vweird.f32 %v1233
        %vm1241 = vmor %vm1239, %vm1240
        %v1242 = vsel %vm1241, %v1233, %v1238
        %v1243 = vmul.f32 %v1226, %v1242
        %v1245 = vperm.slane %v1220, 0
        %v1247 = vmul.f32 %v1243, %v1245
        %v1249 = vperm.slane %v1221, 0
        %v1251 = vadd.f32 %v1247, %v1249
        %v1252 = vpack.c.bf16 %v1251, %v1251
        %v1253 = vld [vmem:[#allocation11] sm:$0xf]
        %v1254 = vld [vmem:[#allocation11 + $0x4] sm:$0xf]
        %v1255 = vld [vmem:[#allocation11 + $0x8] sm:$0xf]
        %v1256 = vld [vmem:[#allocation11 + $0xc] sm:$0xf]
        %v1257 = vld [vmem:[%s12] sm:$0x1]
        %v1259 = vperm.slane %v1257, 0
        %v1265 = vunpack.c.l.b16 %v1253
        %v1266 = vunpack.c.l.b16 %v1254
        %v1267 = vunpack.c.l.b16 %v1255
        %v1268 = vunpack.c.l.b16 %v1256
        %v1269 = vpack.c.b16 %v1266, %v1265
        %v1270 = vpack.c.b16 %v1268, %v1267
        %v1274 = vsel %vm571, %v1252, 0
        %1276 = vmatpush.bf16.msra.mxu0 0
        %1277 = vmatpush.bf16.msra.mxu0 0
        %1278 = vmatpush.bf16.msra.mxu0 0
        %1279 = vmatpush.bf16.msra.mxu0 0
        %1280 = vmatpush.bf16.msra.mxu0 0
        %1281 = vmatpush.bf16.msra.mxu0 0
        %1282 = vmatpush.bf16.msra.mxu0 %v1270
        %1283 = vmatpush.bf16.msra.mxu0 %v1269
        %1284 = vmatmul.bf16.gmra.mxu0 %v1274
        %v1285 = vpop.f32.mrf.mxu0
        %v1286 = vadd.f32 %v1259, %v1285
        %v1287 = vpop.f32.mrf.mxu0
        %1288 = vdwg.mxu0
        %v1289 = vmax.f32 %v1286, 0.0
        %v1290 = vpack.c.bf16 %v1289, %v1289
        %v1291 = vld [vmem:[%s13] sm:$0xf]
        %v1292 = vld [vmem:[%s13 + $0x4] sm:$0xf]
        %v1293 = vld [vmem:[%s13 + $0x8] sm:$0xf]
        %v1294 = vld [vmem:[%s13 + $0xc] sm:$0xf]
        %v1295 = vld [vmem:[%s13 + $0x10] sm:$0xf]
        %v1296 = vld [vmem:[%s13 + $0x14] sm:$0xf]
        %v1297 = vld [vmem:[%s13 + $0x18] sm:$0xf]
        %v1298 = vld [vmem:[%s13 + $0x1c] sm:$0xf]
        %v1299 = vld [vmem:[%s13 + $0x20] sm:$0xf]
        %v1300 = vld [vmem:[%s13 + $0x24] sm:$0xf]
        %v1301 = vld [vmem:[%s13 + $0x28] sm:$0xf]
        %v1302 = vld [vmem:[%s13 + $0x2c] sm:$0xf]
        %v1303 = vld [vmem:[%s13 + $0x30] sm:$0xf]
        %v1304 = vld [vmem:[%s13 + $0x34] sm:$0xf]
        %v1305 = vld [vmem:[%s13 + $0x38] sm:$0xf]
        %v1306 = vld [vmem:[%s13 + $0x3c] sm:$0xf]
        %v1307 = vld [vmem:[%s14] sm:$0x1]
        %v1309 = vperm.slane %v1307, 0
        %v1327 = vunpack.c.l.b16 %v1291
        %v1328 = vunpack.c.l.b16 %v1292
        %v1329 = vunpack.c.l.b16 %v1293
        %v1330 = vunpack.c.l.b16 %v1294
        %v1331 = vunpack.c.l.b16 %v1295
        %v1332 = vunpack.c.l.b16 %v1296
        %v1333 = vunpack.c.l.b16 %v1297
        %v1334 = vunpack.c.l.b16 %v1298
        %v1335 = vunpack.c.l.b16 %v1299
        %v1336 = vunpack.c.l.b16 %v1300
        %v1337 = vunpack.c.l.b16 %v1301
        %v1338 = vunpack.c.l.b16 %v1302
        %v1339 = vunpack.c.l.b16 %v1303
        %v1340 = vunpack.c.l.b16 %v1304
        %v1341 = vunpack.c.l.b16 %v1305
        %v1342 = vunpack.c.l.b16 %v1306
        %v1343 = vpack.c.b16 %v1328, %v1327
        %v1344 = vpack.c.b16 %v1330, %v1329
        %v1345 = vpack.c.b16 %v1332, %v1331
        %v1346 = vpack.c.b16 %v1334, %v1333
        %v1347 = vpack.c.b16 %v1336, %v1335
        %v1348 = vpack.c.b16 %v1338, %v1337
        %v1349 = vpack.c.b16 %v1340, %v1339
        %v1350 = vpack.c.b16 %v1342, %v1341
        %1359 = vmatpush.bf16.msra.mxu0 %v1350
        %1360 = vmatpush.bf16.msra.mxu0 %v1349
        %1361 = vmatpush.bf16.msra.mxu0 %v1348
        %1362 = vmatpush.bf16.msra.mxu0 %v1347
        %1363 = vmatpush.bf16.msra.mxu0 %v1346
        %1364 = vmatpush.bf16.msra.mxu0 %v1345
        %1365 = vmatpush.bf16.msra.mxu0 %v1344
        %1366 = vmatpush.bf16.msra.mxu0 %v1343
        %1367 = vmatmul.bf16.gmra.mxu0 %v1290
        %v1368 = vpop.f32.mrf.mxu0
        %v1369 = vadd.f32 %v1309, %v1368
        %v1370 = vpop.f32.mrf.mxu0
        %1371 = vdwg.mxu0
        %v1372 = vadd.f32 %v1219, %v1369
        %1373 = vst.msk [vmem:[%s554] sm:$0xff] %vm571, %v1372
        %s1374 = sand.u32 %s380, 1
        %s1375 = scalar_lea.sflag [#allocation10], %s1374
        %s1376 = sand.u32 %s380, 1
        %s1377 = smul.addr %s1376, 8
        %s1378 = scalar_lea.vmem [#allocation13], %s1377
        // Predicated region
        $region96: #{tpu_custom_call.1} parent=79 // pred_check
          %p1379 = pneg %p390
        $region97: #{tpu_custom_call.1} parent=79 // pred_check_branch
          %1381 = sbr.rel (%p1379) target = $region99
        $region98: #{tpu_custom_call.1} parent=79 // pred_region
          %1383 = vsyncadd %s1375, 0
          %s1384 = sadd.s32 %s36, %s35
          %s1385 = smul.addr %s1384, 8
          %s1386 = scalar_lea.hbm %s15, %s1385
          %s1388 = sshll.u32 %s1378, 4
          %s1389 = int_to_ptr.vmem [resolvable:$true] %s1388
          %s1390 = sshll.u32 %s1386, 4
          %s1391 = int_to_ptr.hbm [resolvable:$true] %s1390
          %1393 = dma.vmem_to_hbm [thread:$0]  %s1389, 128, %s1391, %s1375
        $region99: #{tpu_custom_call.1} parent=79 // pred_fallthru
          _
      $region80: #{tpu_custom_call.1} parent=5 // pred_fallthru
        _
      %p1394 = scmp.le.s32.totalorder 2, %s26
      // Predicated region
      $region100: #{tpu_custom_call.1} parent=5 // pred_check
        %p1395 = pneg %p1394
      $region101: #{tpu_custom_call.1} parent=5 // pred_check_branch
        %1397 = sbr.rel (%p1395) target = $region103
      $region102: #{tpu_custom_call.1} parent=5 // pred_region
        %s1398 = ssub.s32 %s26, 2
        // Predicated region
        $region104: #{tpu_custom_call.1} parent=102 // pred_check
          %p1399 = pneg %p396
        $region105: #{tpu_custom_call.1} parent=102 // pred_check_branch
          %1401 = sbr.rel (%p1399) target = $region107
        $region106: #{tpu_custom_call.1} parent=102 // pred_region
          %s1402 = sand.u32 %s381, 1
          %s1403 = scalar_lea.sflag [#allocation10], %s1402
          %s1404 = sand.u32 %s381, 1
          %s1405 = smul.addr %s1404, 8
          %s1406 = scalar_lea.vmem [#allocation13], %s1405
          %1408 = dma.done %s1403, 128
        $region107: #{tpu_custom_call.1} parent=102 // pred_fallthru
          _
      $region103: #{tpu_custom_call.1} parent=5 // pred_fallthru
        _
    $region6: #{tpu_custom_call.1} parent=1 // loop_footer
      %s30 = sadd.s32 1, %s26
    $region7: #{tpu_custom_call.1} parent=1 // loop_footer_branch
      %25 = sbr.rel target = $region3
    $region8: #{tpu_custom_call.1} parent=1 // loop_exit
      _
    %1409 = vsyncpa [#allocation9], 1
    %s1410 = scalar_lea.sflag [#allocation9], 1
    %1411 = vsyncpa %s1410, 1
    %1412 = vsyncpa [#allocation12], 1
    %1413 = vsyncpa [#allocation10], 1
    %s1414 = scalar_lea.sflag [#allocation10], 1
    %1415 = vsyncpa %s1414, 1

</llo_original>
